<compile_context>
chip_gen: v5e
topology: v5e:2x2
jax: 0.10.0
libtpu: 0.0.40
codegen_flags: <defaults>
</compile_context>

<pallas_src>
import jax
import jax.numpy as jnp
from jax.experimental import pallas as pl
from jax.experimental.pallas import tpu as pltpu

D_MODEL = 32
N_HEAD = 4
FFN_HIDDEN = 64
EPS = 1e-12            # LayerNoraml eps from the reference tutorial implementation
NEG_INF = -1e9
MXU_DTYPE = jnp.bfloat16   # matmul operand dtype (f32 accumulation); set to jnp.float32 to disable


# ---------------------------------------------------------------------------
# In-kernel helpers (traced into the Pallas body; all matmuls hit the MXU)
# ---------------------------------------------------------------------------
def _attention(q, k, v, bias, wo):
    """Multi-head attention core on flattened (B*T, D) operands.

    Batch separation, the user mask and key padding are all encoded in the
    additive `bias` (0 = attend, NEG_INF = blocked), so per-head scores are a
    single block-diagonal (Mq, Mk) matmul.  Each head's context is folded
    through its sublane slice of the output projection (no concatenate).
    """
    Mq, D = q.shape
    dh = D // N_HEAD
    scale = 1.0 / jnp.sqrt(jnp.float32(dh))
    q16 = (q * scale).astype(MXU_DTYPE)   # fold 1/sqrt(dh) once, before the head loop
    k16 = k.astype(MXU_DTYPE)
    v16 = v.astype(MXU_DTYPE)

    out = jnp.zeros((Mq, D), jnp.float32)
    for h in range(N_HEAD):               # static unroll; heads are tiny
        qh = q16[:, h * dh:(h + 1) * dh]
        kh = k16[:, h * dh:(h + 1) * dh]
        vh = v16[:, h * dh:(h + 1) * dh]
        s = jax.lax.dot_general(qh, kh, (((1,), (1,)), ((), ())),
                                preferred_element_type=jnp.float32)
        s = s + bias                       # additive mask: no compare / select
        m = jnp.max(s, axis=-1, keepdims=True)
        e = jnp.exp(s - m)                 # EUP
        p = e * pl.reciprocal(jnp.sum(e, axis=-1, keepdims=True), approx=True)
        ctx = jnp.dot(p.astype(MXU_DTYPE), vh, preferred_element_type=jnp.float32)
        # accumulate this head's share of the output projection -> no concat
        out = out + jnp.dot(ctx.astype(MXU_DTYPE), wo[h * dh:(h + 1) * dh, :],
                            preferred_element_type=jnp.float32)
    return out


def _layer_norm(x, gamma, beta):
    mean = jnp.mean(x, axis=-1, keepdims=True)
    var = jnp.mean((x - mean) ** 2, axis=-1, keepdims=True)
    return (x - mean) * jax.lax.rsqrt(var + EPS) * gamma + beta


# ---------------------------------------------------------------------------
# Fused decoder-layer kernel (single grid step, whole batch resident in VMEM)
# ---------------------------------------------------------------------------
def decoder_layer_kernel(dec_ref, enc_ref, tbias_ref, sbias_ref,
                         wqkv1, bqkv1, wo1, bo1, g1, be1,
                         wq2, bq2, wkv2, bkv2, wo2, bo2, g2, be2,
                         wf1, bf1, wf2, bf2, g3, be3,
                         out_ref):
    dec = dec_ref[...]                     # (B*Tq, D)      f32
    enc = enc_ref[...]                     # (B*Tk_pad, D)  f32
    D = dec.shape[-1]

    # --- masked self-attention + (dropout=identity) + residual + layernorm ---
    qkv = jnp.dot(dec.astype(MXU_DTYPE), wqkv1[...],
                  preferred_element_type=jnp.float32) + bqkv1[...]
    attn1 = _attention(qkv[:, :D], qkv[:, D:2 * D], qkv[:, 2 * D:],
                       tbias_ref[...], wo1[...]) + bo1[...]
    x = _layer_norm(attn1 + dec, g1[...], be1[...])

    # --- cross-attention over encoder output + residual + layernorm ----------
    q2 = jnp.dot(x.astype(MXU_DTYPE), wq2[...],
                 preferred_element_type=jnp.float32) + bq2[...]
    kv2 = jnp.dot(enc.astype(MXU_DTYPE), wkv2[...],
                  preferred_element_type=jnp.float32) + bkv2[...]
    attn2 = _attention(q2, kv2[:, :D], kv2[:, D:],
                       sbias_ref[...], wo2[...]) + bo2[...]
    y = _layer_norm(attn2 + x, g2[...], be2[...])

    # --- position-wise feed-forward (Linear -> ReLU -> Linear) + residual + LN
    h = jnp.maximum(jnp.dot(y.astype(MXU_DTYPE), wf1[...],
                            preferred_element_type=jnp.float32) + bf1[...], 0.0)
    z = jnp.dot(h.astype(MXU_DTYPE), wf2[...],
                preferred_element_type=jnp.float32) + bf2[...]
    out_ref[...] = _layer_norm(z + y, g3[...], be3[...])


# ---------------------------------------------------------------------------
# Wrapper: flatten batch, pad encoder keys, build additive biases, pack weights
# ---------------------------------------------------------------------------
def _block_diag_bias(mask, B, Tq, Tk, Tk_pad):
    """mask: (B, 1, Tq, Tk), nonzero = keep.  Returns (B*Tq, B*Tk_pad) additive
    bias encoding the user mask, the block-diagonal batch structure and key
    padding: 0.0 where attention is allowed, NEG_INF where it is blocked."""
    m = (mask[:, 0] != 0.0).astype(jnp.float32)                   # (B, Tq, Tk)
    m = jnp.pad(m, ((0, 0), (0, 0), (0, Tk_pad - Tk)))            # pad keys -> blocked
    same_batch = jnp.eye(B, dtype=jnp.float32)[:, None, :, None]  # (B, 1, B, 1)
    allowed = same_batch * m[:, :, None, :]                       # (B, Tq, B, Tk_pad)
    return ((1.0 - allowed) * NEG_INF).reshape(B * Tq, B * Tk_pad)


def _pack_params(params):
    (wq1, bq1, wk1, bk1, wv1, bv1, wo1, bo1, g1, be1,
     wq2, bq2, wk2, bk2, wv2, bv2, wo2, bo2, g2, be2,
     wf1, bf1, wf2, bf2, g3, be3) = params
    bf = lambda w: w.astype(MXU_DTYPE)            # narrow MXU operands only
    wqkv1 = bf(jnp.concatenate([wq1, wk1, wv1], axis=1))   # (D, 3D)
    bqkv1 = jnp.concatenate([bq1, bk1, bv1], axis=1)       # (1, 3D)  f32
    wkv2 = bf(jnp.concatenate([wk2, wv2], axis=1))         # (D, 2D)
    bkv2 = jnp.concatenate([bk2, bv2], axis=1)             # (1, 2D)  f32
    return (wqkv1, bqkv1, bf(wo1), bo1, g1, be1,
            bf(wq2), bq2, wkv2, bkv2, bf(wo2), bo2, g2, be2,
            bf(wf1), bf1, bf(wf2), bf2, g3, be3)


def decoder_layer(dec, enc, t_mask, s_mask, params):
    B, Tq, D = dec.shape
    Tk = enc.shape[1]
    Tk_pad = ((Tk + 7) // 8) * 8          # pad encoder length to sublane multiple
    Mq, Mk = B * Tq, B * Tk_pad

    dec2d = dec.reshape(Mq, D)
    enc2d = jnp.pad(enc, ((0, 0), (0, Tk_pad - Tk), (0, 0))).reshape(Mk, D)
    t_bias = _block_diag_bias(t_mask, B, Tq, Tq, Tq)       # (Mq, B*Tq)
    s_bias = _block_diag_bias(s_mask, B, Tq, Tk, Tk_pad)   # (Mq, Mk)
    kernel_params = _pack_params(params)

    def full_block(shape):
        nd = len(shape)
        return pl.BlockSpec(shape, lambda *_: (0,) * nd)   # whole array, every step

    in_specs = [
        full_block((Mq, D)),         # dec2d
        full_block((Mk, D)),         # enc2d (padded)
        full_block((Mq, B * Tq)),    # self-attn additive bias
        full_block((Mq, Mk)),        # cross-attn additive bias
    ] + [full_block(p.shape) for p in kernel_params]

    out2d = pl.pallas_call(
        decoder_layer_kernel,
        out_shape=jax.ShapeDtypeStruct((Mq, D), jnp.float32),
        grid_spec=pltpu.PrefetchScalarGridSpec(
            num_scalar_prefetch=0,
            grid=(1,),                                     # one step: whole batch
            in_specs=in_specs,
            out_specs=full_block((Mq, D)),
        ),
        compiler_params=pltpu.CompilerParams(dimension_semantics=("arbitrary",)),
    )(dec2d, enc2d, t_bias, s_bias, *kernel_params)
    return out2d.reshape(B, Tq, D)


# ---------------------------------------------------------------------------
# Deterministic parameter init (shapes follow the nn.Module __init__)
# Linear weights stored as (in, out) == transpose of PyTorch's (out, in).
# ---------------------------------------------------------------------------
def init_params(key, d_model, ffn_hidden):
    keys = iter(jax.random.split(key, 40))

    def lin(din, dout):
        w = jax.random.normal(next(keys), (din, dout), jnp.float32) / jnp.sqrt(jnp.float32(din))
        b = 0.01 * jax.random.normal(next(keys), (1, dout), jnp.float32)
        return w, b

    def ln_params():
        return jnp.ones((1, d_model), jnp.float32), jnp.zeros((1, d_model), jnp.float32)

    wq1, bq1 = lin(d_model, d_model); wk1, bk1 = lin(d_model, d_model)
    wv1, bv1 = lin(d_model, d_model); wo1, bo1 = lin(d_model, d_model)
    g1, be1 = ln_params()
    wq2, bq2 = lin(d_model, d_model); wk2, bk2 = lin(d_model, d_model)
    wv2, bv2 = lin(d_model, d_model); wo2, bo2 = lin(d_model, d_model)
    g2, be2 = ln_params()
    wf1, bf1 = lin(d_model, ffn_hidden); wf2, bf2 = lin(ffn_hidden, d_model)
    g3, be3 = ln_params()
    return (wq1, bq1, wk1, bk1, wv1, bv1, wo1, bo1, g1, be1,
            wq2, bq2, wk2, bk2, wv2, bv2, wo2, bo2, g2, be2,
            wf1, bf1, wf2, bf2, g3, be3)


# ---------------------------------------------------------------------------
# Pure-JAX reference (mirrors the PyTorch forward in eval mode, all f32)
# ---------------------------------------------------------------------------
def reference(dec, enc, t_mask, s_mask, params):
    (wq1, bq1, wk1, bk1, wv1, bv1, wo1, bo1, g1, be1,
     wq2, bq2, wk2, bk2, wv2, bv2, wo2, bo2, g2, be2,
     wf1, bf1, wf2, bf2, g3, be3) = params
    hi = jax.lax.Precision.HIGHEST

    def mha(xq, xkv, mask, wq, bq, wk, bk, wv, bv, wo, bo):
        B, Tq, D = xq.shape
        Tk = xkv.shape[1]
        dh = D // N_HEAD
        q = jnp.matmul(xq, wq, precision=hi) + bq
        k = jnp.matmul(xkv, wk, precision=hi) + bk
        v = jnp.matmul(xkv, wv, precision=hi) + bv
        q = q.reshape(B, Tq, N_HEAD, dh).transpose(0, 2, 1, 3)
        k = k.reshape(B, Tk, N_HEAD, dh).transpose(0, 2, 1, 3)
        v = v.reshape(B, Tk, N_HEAD, dh).transpose(0, 2, 1, 3)
        s = jnp.einsum('bhqd,bhkd->bhqk', q, k, precision=hi) / jnp.sqrt(jnp.float32(dh))
        s = jnp.where(mask == 0.0, NEG_INF, s)
        p = jax.nn.softmax(s, axis=-1)
        o = jnp.einsum('bhqk,bhkd->bhqd', p, v, precision=hi)
        o = o.transpose(0, 2, 1, 3).reshape(B, Tq, D)
        return jnp.matmul(o, wo, precision=hi) + bo

    def ln(x, g, b):
        m = x.mean(-1, keepdims=True)
        var = ((x - m) ** 2).mean(-1, keepdims=True)
        return (x - m) / jnp.sqrt(var + EPS) * g + b

    x = ln(mha(dec, dec, t_mask, wq1, bq1, wk1, bk1, wv1, bv1, wo1, bo1) + dec, g1, be1)
    y = ln(mha(x, enc, s_mask, wq2, bq2, wk2, bk2, wv2, bv2, wo2, bo2) + x, g2, be2)
    h = jnp.maximum(jnp.matmul(y, wf1, precision=hi) + bf1, 0.0)
    z = jnp.matmul(h, wf2, precision=hi) + bf2
    return ln(z + y, g3, be3)


if __name__ == "__main__":
    B, T_DEC, T_ENC = 2, 8, 12
    key = jax.random.PRNGKey(0)
    k_dec, k_enc, k_par = jax.random.split(key, 3)

    dec = jax.random.normal(k_dec, (B, T_DEC, D_MODEL), jnp.float32)
    enc = jax.random.normal(k_enc, (B, T_ENC, D_MODEL), jnp.float32)

    # causal target mask, full source mask with a couple of padded encoder positions
    t_mask = jnp.broadcast_to(jnp.tril(jnp.ones((T_DEC, T_DEC), jnp.float32))[None, None],
                              (B, 1, T_DEC, T_DEC))
    s_mask = jnp.ones((B, 1, T_DEC, T_ENC), jnp.float32)
    s_mask = s_mask.at[1, :, :, T_ENC - 2:].set(0.0)

    params = init_params(k_par, D_MODEL, FFN_HIDDEN)

    out = decoder_layer(dec, enc, t_mask, s_mask, params)
    out = jax.block_until_ready(out)

    ref = jax.block_until_ready(reference(dec, enc, t_mask, s_mask, params))
    assert out.shape == (B, T_DEC, D_MODEL)
    # tolerance accounts for bf16 MXU operands (f32 accumulation); f32 path is exact-ish.
    tol = 1e-1 if MXU_DTYPE == jnp.bfloat16 else 1e-4
    assert jnp.allclose(out, ref, atol=tol, rtol=tol), "mismatch vs reference"

    print("KERNEL_OK")
</pallas_src>

<mosaic_0001>
module attributes {stable_mosaic.version = 11 : i64} {
  func.func @decoder_layer_kernel(%arg0: i32, %arg1: memref<16x32xf32, #tpu.memory_space<vmem>>, %arg2: memref<32x32xf32, #tpu.memory_space<vmem>>, %arg3: memref<16x16xf32, #tpu.memory_space<vmem>>, %arg4: memref<16x32xf32, #tpu.memory_space<vmem>>, %arg5: memref<32x96xbf16, #tpu.memory_space<vmem>>, %arg6: memref<1x96xf32, #tpu.memory_space<vmem>>, %arg7: memref<32x32xbf16, #tpu.memory_space<vmem>>, %arg8: memref<1x32xf32, #tpu.memory_space<vmem>>, %arg9: memref<1x32xf32, #tpu.memory_space<vmem>>, %arg10: memref<1x32xf32, #tpu.memory_space<vmem>>, %arg11: memref<32x32xbf16, #tpu.memory_space<vmem>>, %arg12: memref<1x32xf32, #tpu.memory_space<vmem>>, %arg13: memref<32x64xbf16, #tpu.memory_space<vmem>>, %arg14: memref<1x64xf32, #tpu.memory_space<vmem>>, %arg15: memref<32x32xbf16, #tpu.memory_space<vmem>>, %arg16: memref<1x32xf32, #tpu.memory_space<vmem>>, %arg17: memref<1x32xf32, #tpu.memory_space<vmem>>, %arg18: memref<1x32xf32, #tpu.memory_space<vmem>>, %arg19: memref<32x64xbf16, #tpu.memory_space<vmem>>, %arg20: memref<1x64xf32, #tpu.memory_space<vmem>>, %arg21: memref<64x32xbf16, #tpu.memory_space<vmem>>, %arg22: memref<1x32xf32, #tpu.memory_space<vmem>>, %arg23: memref<1x32xf32, #tpu.memory_space<vmem>>, %arg24: memref<1x32xf32, #tpu.memory_space<vmem>>, %arg25: memref<16x32xf32, #tpu.memory_space<vmem>>) attributes {dimension_semantics = [#tpu.dimension_semantics<arbitrary>], iteration_bounds = array<i64: 1>, scalar_prefetch = 0 : i64, scratch_operands = 0 : i64, tpu.core_type = #tpu.core_type<tc>, window_params = [{pipeline_mode = #tpu.pipeline_mode<synchronous>, transform_indices = @transform_0, window_bounds = array<i64: 16, 32>}, {pipeline_mode = #tpu.pipeline_mode<synchronous>, transform_indices = @transform_1, window_bounds = array<i64: 32, 32>}, {pipeline_mode = #tpu.pipeline_mode<synchronous>, transform_indices = @transform_2, window_bounds = array<i64: 16, 16>}, {pipeline_mode = #tpu.pipeline_mode<synchronous>, transform_indices = @transform_3, window_bounds = array<i64: 16, 32>}, {pipeline_mode = #tpu.pipeline_mode<synchronous>, transform_indices = @transform_4, window_bounds = array<i64: 32, 96>}, {pipeline_mode = #tpu.pipeline_mode<synchronous>, transform_indices = @transform_5, window_bounds = array<i64: 1, 96>}, {pipeline_mode = #tpu.pipeline_mode<synchronous>, transform_indices = @transform_6, window_bounds = array<i64: 32, 32>}, {pipeline_mode = #tpu.pipeline_mode<synchronous>, transform_indices = @transform_7, window_bounds = array<i64: 1, 32>}, {pipeline_mode = #tpu.pipeline_mode<synchronous>, transform_indices = @transform_8, window_bounds = array<i64: 1, 32>}, {pipeline_mode = #tpu.pipeline_mode<synchronous>, transform_indices = @transform_9, window_bounds = array<i64: 1, 32>}, {pipeline_mode = #tpu.pipeline_mode<synchronous>, transform_indices = @transform_10, window_bounds = array<i64: 32, 32>}, {pipeline_mode = #tpu.pipeline_mode<synchronous>, transform_indices = @transform_11, window_bounds = array<i64: 1, 32>}, {pipeline_mode = #tpu.pipeline_mode<synchronous>, transform_indices = @transform_12, window_bounds = array<i64: 32, 64>}, {pipeline_mode = #tpu.pipeline_mode<synchronous>, transform_indices = @transform_13, window_bounds = array<i64: 1, 64>}, {pipeline_mode = #tpu.pipeline_mode<synchronous>, transform_indices = @transform_14, window_bounds = array<i64: 32, 32>}, {pipeline_mode = #tpu.pipeline_mode<synchronous>, transform_indices = @transform_15, window_bounds = array<i64: 1, 32>}, {pipeline_mode = #tpu.pipeline_mode<synchronous>, transform_indices = @transform_16, window_bounds = array<i64: 1, 32>}, {pipeline_mode = #tpu.pipeline_mode<synchronous>, transform_indices = @transform_17, window_bounds = array<i64: 1, 32>}, {pipeline_mode = #tpu.pipeline_mode<synchronous>, transform_indices = @transform_18, window_bounds = array<i64: 32, 64>}, {pipeline_mode = #tpu.pipeline_mode<synchronous>, transform_indices = @transform_19, window_bounds = array<i64: 1, 64>}, {pipeline_mode = #tpu.pipeline_mode<synchronous>, transform_indices = @transform_20, window_bounds = array<i64: 64, 32>}, {pipeline_mode = #tpu.pipeline_mode<synchronous>, transform_indices = @transform_21, window_bounds = array<i64: 1, 32>}, {pipeline_mode = #tpu.pipeline_mode<synchronous>, transform_indices = @transform_22, window_bounds = array<i64: 1, 32>}, {pipeline_mode = #tpu.pipeline_mode<synchronous>, transform_indices = @transform_23, window_bounds = array<i64: 1, 32>}, {pipeline_mode = #tpu.pipeline_mode<synchronous>, transform_indices = @transform_24, window_bounds = array<i64: 16, 32>}]} {
    %c0 = arith.constant 0 : index
    %c0_0 = arith.constant 0 : index
    %0 = vector.load %arg1[%c0, %c0_0] : memref<16x32xf32, #tpu.memory_space<vmem>>, vector<16x32xf32>
    %c0_1 = arith.constant 0 : index
    %c0_2 = arith.constant 0 : index
    %1 = vector.load %arg2[%c0_1, %c0_2] : memref<32x32xf32, #tpu.memory_space<vmem>>, vector<32x32xf32>
    %2 = arith.truncf %0 : vector<16x32xf32> to vector<16x32xbf16>
    %c0_3 = arith.constant 0 : index
    %c0_4 = arith.constant 0 : index
    %3 = vector.load %arg5[%c0_3, %c0_4] : memref<32x96xbf16, #tpu.memory_space<vmem>>, vector<32x96xbf16>
    %cst = arith.constant dense<0.000000e+00> : vector<16x96xf32>
    %4 = tpu.matmul %2, %3, %cst {dimension_numbers = #tpu.dot_dimension_numbers<[1], [0], [0], [1], [0, 0, 1, 1], [], []>} : vector<16x32xbf16>, vector<32x96xbf16>, vector<16x96xf32> -> vector<16x96xf32>
    %c0_5 = arith.constant 0 : index
    %c0_6 = arith.constant 0 : index
    %5 = vector.load %arg6[%c0_5, %c0_6] : memref<1x96xf32, #tpu.memory_space<vmem>>, vector<1x96xf32>
    %6 = vector.broadcast %5 : vector<1x96xf32> to vector<16x96xf32>
    %7 = arith.addf %4, %6 : vector<16x96xf32>
    %8 = vector.extract_strided_slice %7 {offsets = [0, 0], sizes = [16, 32], strides = [1, 1]} : vector<16x96xf32> to vector<16x32xf32>
    %9 = vector.extract_strided_slice %7 {offsets = [0, 32], sizes = [16, 32], strides = [1, 1]} : vector<16x96xf32> to vector<16x32xf32>
    %10 = vector.extract_strided_slice %7 {offsets = [0, 64], sizes = [16, 32], strides = [1, 1]} : vector<16x96xf32> to vector<16x32xf32>
    %c0_7 = arith.constant 0 : index
    %c0_8 = arith.constant 0 : index
    %11 = vector.load %arg3[%c0_7, %c0_8] : memref<16x16xf32, #tpu.memory_space<vmem>>, vector<16x16xf32>
    %c0_9 = arith.constant 0 : index
    %c0_10 = arith.constant 0 : index
    %12 = vector.load %arg7[%c0_9, %c0_10] : memref<32x32xbf16, #tpu.memory_space<vmem>>, vector<32x32xbf16>
    %cst_11 = arith.constant 8.000000e+00 : f32
    %13 = math.sqrt %cst_11 : f32
    %cst_12 = arith.constant 1.000000e+00 : f32
    %14 = arith.divf %cst_12, %13 : f32
    %15 = vector.broadcast %14 : f32 to vector<16x32xf32>
    %16 = arith.mulf %8, %15 : vector<16x32xf32>
    %17 = arith.truncf %16 : vector<16x32xf32> to vector<16x32xbf16>
    %18 = arith.truncf %9 : vector<16x32xf32> to vector<16x32xbf16>
    %19 = arith.truncf %10 : vector<16x32xf32> to vector<16x32xbf16>
    %cst_13 = arith.constant 0.000000e+00 : f32
    %20 = vector.broadcast %cst_13 : f32 to vector<16x32xf32>
    %21 = vector.extract_strided_slice %17 {offsets = [0, 0], sizes = [16, 8], strides = [1, 1]} : vector<16x32xbf16> to vector<16x8xbf16>
    %22 = vector.extract_strided_slice %18 {offsets = [0, 0], sizes = [16, 8], strides = [1, 1]} : vector<16x32xbf16> to vector<16x8xbf16>
    %23 = vector.extract_strided_slice %19 {offsets = [0, 0], sizes = [16, 8], strides = [1, 1]} : vector<16x32xbf16> to vector<16x8xbf16>
    %cst_14 = arith.constant dense<0.000000e+00> : vector<16x16xf32>
    %24 = tpu.matmul %21, %22, %cst_14 {dimension_numbers = #tpu.dot_dimension_numbers<[1], [1], [0], [0], [0, 0, 1, 0], [], []>} : vector<16x8xbf16>, vector<16x8xbf16>, vector<16x16xf32> -> vector<16x16xf32>
    %25 = arith.addf %24, %11 : vector<16x16xf32>
    %cst_15 = arith.constant dense<0xFF800000> : vector<16xf32>
    %26 = vector.multi_reduction <maximumf>, %25, %cst_15 [1] : vector<16x16xf32> to vector<16xf32>
    %27 = vector.shape_cast %26 : vector<16xf32> to vector<16x1xf32>
    %28 = vector.broadcast %27 : vector<16x1xf32> to vector<16x16xf32>
    %29 = arith.subf %25, %28 : vector<16x16xf32>
    %30 = math.exp %29 : vector<16x16xf32>
    %cst_16 = arith.constant dense<0.000000e+00> : vector<16xf32>
    %31 = vector.multi_reduction <add>, %30, %cst_16 [1] : vector<16x16xf32> to vector<16xf32>
    %32 = vector.shape_cast %31 : vector<16xf32> to vector<16x1xf32>
    %33 = tpu.reciprocal %32 {approx = true} : vector<16x1xf32> -> vector<16x1xf32>
    %34 = vector.broadcast %33 : vector<16x1xf32> to vector<16x16xf32>
    %35 = arith.mulf %30, %34 : vector<16x16xf32>
    %36 = arith.truncf %35 : vector<16x16xf32> to vector<16x16xbf16>
    %cst_17 = arith.constant dense<0.000000e+00> : vector<16x8xf32>
    %37 = tpu.matmul %36, %23, %cst_17 {dimension_numbers = #tpu.dot_dimension_numbers<[1], [0], [0], [1], [0, 0, 1, 1], [], []>} : vector<16x16xbf16>, vector<16x8xbf16>, vector<16x8xf32> -> vector<16x8xf32>
    %38 = arith.truncf %37 : vector<16x8xf32> to vector<16x8xbf16>
    %39 = vector.extract_strided_slice %12 {offsets = [0, 0], sizes = [8, 32], strides = [1, 1]} : vector<32x32xbf16> to vector<8x32xbf16>
    %cst_18 = arith.constant dense<0.000000e+00> : vector<16x32xf32>
    %40 = tpu.matmul %38, %39, %cst_18 {dimension_numbers = #tpu.dot_dimension_numbers<[1], [0], [0], [1], [0, 0, 1, 1], [], []>} : vector<16x8xbf16>, vector<8x32xbf16>, vector<16x32xf32> -> vector<16x32xf32>
    %41 = arith.addf %20, %40 : vector<16x32xf32>
    %42 = vector.extract_strided_slice %17 {offsets = [0, 8], sizes = [16, 8], strides = [1, 1]} : vector<16x32xbf16> to vector<16x8xbf16>
    %43 = vector.extract_strided_slice %18 {offsets = [0, 8], sizes = [16, 8], strides = [1, 1]} : vector<16x32xbf16> to vector<16x8xbf16>
    %44 = vector.extract_strided_slice %19 {offsets = [0, 8], sizes = [16, 8], strides = [1, 1]} : vector<16x32xbf16> to vector<16x8xbf16>
    %cst_19 = arith.constant dense<0.000000e+00> : vector<16x16xf32>
    %45 = tpu.matmul %42, %43, %cst_19 {dimension_numbers = #tpu.dot_dimension_numbers<[1], [1], [0], [0], [0, 0, 1, 0], [], []>} : vector<16x8xbf16>, vector<16x8xbf16>, vector<16x16xf32> -> vector<16x16xf32>
    %46 = arith.addf %45, %11 : vector<16x16xf32>
    %cst_20 = arith.constant dense<0xFF800000> : vector<16xf32>
    %47 = vector.multi_reduction <maximumf>, %46, %cst_20 [1] : vector<16x16xf32> to vector<16xf32>
    %48 = vector.shape_cast %47 : vector<16xf32> to vector<16x1xf32>
    %49 = vector.broadcast %48 : vector<16x1xf32> to vector<16x16xf32>
    %50 = arith.subf %46, %49 : vector<16x16xf32>
    %51 = math.exp %50 : vector<16x16xf32>
    %cst_21 = arith.constant dense<0.000000e+00> : vector<16xf32>
    %52 = vector.multi_reduction <add>, %51, %cst_21 [1] : vector<16x16xf32> to vector<16xf32>
    %53 = vector.shape_cast %52 : vector<16xf32> to vector<16x1xf32>
    %54 = tpu.reciprocal %53 {approx = true} : vector<16x1xf32> -> vector<16x1xf32>
    %55 = vector.broadcast %54 : vector<16x1xf32> to vector<16x16xf32>
    %56 = arith.mulf %51, %55 : vector<16x16xf32>
    %57 = arith.truncf %56 : vector<16x16xf32> to vector<16x16xbf16>
    %cst_22 = arith.constant dense<0.000000e+00> : vector<16x8xf32>
    %58 = tpu.matmul %57, %44, %cst_22 {dimension_numbers = #tpu.dot_dimension_numbers<[1], [0], [0], [1], [0, 0, 1, 1], [], []>} : vector<16x16xbf16>, vector<16x8xbf16>, vector<16x8xf32> -> vector<16x8xf32>
    %59 = arith.truncf %58 : vector<16x8xf32> to vector<16x8xbf16>
    %60 = vector.extract_strided_slice %12 {offsets = [8, 0], sizes = [8, 32], strides = [1, 1]} : vector<32x32xbf16> to vector<8x32xbf16>
    %cst_23 = arith.constant dense<0.000000e+00> : vector<16x32xf32>
    %61 = tpu.matmul %59, %60, %cst_23 {dimension_numbers = #tpu.dot_dimension_numbers<[1], [0], [0], [1], [0, 0, 1, 1], [], []>} : vector<16x8xbf16>, vector<8x32xbf16>, vector<16x32xf32> -> vector<16x32xf32>
    %62 = arith.addf %41, %61 : vector<16x32xf32>
    %63 = vector.extract_strided_slice %17 {offsets = [0, 16], sizes = [16, 8], strides = [1, 1]} : vector<16x32xbf16> to vector<16x8xbf16>
    %64 = vector.extract_strided_slice %18 {offsets = [0, 16], sizes = [16, 8], strides = [1, 1]} : vector<16x32xbf16> to vector<16x8xbf16>
    %65 = vector.extract_strided_slice %19 {offsets = [0, 16], sizes = [16, 8], strides = [1, 1]} : vector<16x32xbf16> to vector<16x8xbf16>
    %cst_24 = arith.constant dense<0.000000e+00> : vector<16x16xf32>
    %66 = tpu.matmul %63, %64, %cst_24 {dimension_numbers = #tpu.dot_dimension_numbers<[1], [1], [0], [0], [0, 0, 1, 0], [], []>} : vector<16x8xbf16>, vector<16x8xbf16>, vector<16x16xf32> -> vector<16x16xf32>
    %67 = arith.addf %66, %11 : vector<16x16xf32>
    %cst_25 = arith.constant dense<0xFF800000> : vector<16xf32>
    %68 = vector.multi_reduction <maximumf>, %67, %cst_25 [1] : vector<16x16xf32> to vector<16xf32>
    %69 = vector.shape_cast %68 : vector<16xf32> to vector<16x1xf32>
    %70 = vector.broadcast %69 : vector<16x1xf32> to vector<16x16xf32>
    %71 = arith.subf %67, %70 : vector<16x16xf32>
    %72 = math.exp %71 : vector<16x16xf32>
    %cst_26 = arith.constant dense<0.000000e+00> : vector<16xf32>
    %73 = vector.multi_reduction <add>, %72, %cst_26 [1] : vector<16x16xf32> to vector<16xf32>
    %74 = vector.shape_cast %73 : vector<16xf32> to vector<16x1xf32>
    %75 = tpu.reciprocal %74 {approx = true} : vector<16x1xf32> -> vector<16x1xf32>
    %76 = vector.broadcast %75 : vector<16x1xf32> to vector<16x16xf32>
    %77 = arith.mulf %72, %76 : vector<16x16xf32>
    %78 = arith.truncf %77 : vector<16x16xf32> to vector<16x16xbf16>
    %cst_27 = arith.constant dense<0.000000e+00> : vector<16x8xf32>
    %79 = tpu.matmul %78, %65, %cst_27 {dimension_numbers = #tpu.dot_dimension_numbers<[1], [0], [0], [1], [0, 0, 1, 1], [], []>} : vector<16x16xbf16>, vector<16x8xbf16>, vector<16x8xf32> -> vector<16x8xf32>
    %80 = arith.truncf %79 : vector<16x8xf32> to vector<16x8xbf16>
    %81 = vector.extract_strided_slice %12 {offsets = [16, 0], sizes = [8, 32], strides = [1, 1]} : vector<32x32xbf16> to vector<8x32xbf16>
    %cst_28 = arith.constant dense<0.000000e+00> : vector<16x32xf32>
    %82 = tpu.matmul %80, %81, %cst_28 {dimension_numbers = #tpu.dot_dimension_numbers<[1], [0], [0], [1], [0, 0, 1, 1], [], []>} : vector<16x8xbf16>, vector<8x32xbf16>, vector<16x32xf32> -> vector<16x32xf32>
    %83 = arith.addf %62, %82 : vector<16x32xf32>
    %84 = vector.extract_strided_slice %17 {offsets = [0, 24], sizes = [16, 8], strides = [1, 1]} : vector<16x32xbf16> to vector<16x8xbf16>
    %85 = vector.extract_strided_slice %18 {offsets = [0, 24], sizes = [16, 8], strides = [1, 1]} : vector<16x32xbf16> to vector<16x8xbf16>
    %86 = vector.extract_strided_slice %19 {offsets = [0, 24], sizes = [16, 8], strides = [1, 1]} : vector<16x32xbf16> to vector<16x8xbf16>
    %cst_29 = arith.constant dense<0.000000e+00> : vector<16x16xf32>
    %87 = tpu.matmul %84, %85, %cst_29 {dimension_numbers = #tpu.dot_dimension_numbers<[1], [1], [0], [0], [0, 0, 1, 0], [], []>} : vector<16x8xbf16>, vector<16x8xbf16>, vector<16x16xf32> -> vector<16x16xf32>
    %88 = arith.addf %87, %11 : vector<16x16xf32>
    %cst_30 = arith.constant dense<0xFF800000> : vector<16xf32>
    %89 = vector.multi_reduction <maximumf>, %88, %cst_30 [1] : vector<16x16xf32> to vector<16xf32>
    %90 = vector.shape_cast %89 : vector<16xf32> to vector<16x1xf32>
    %91 = vector.broadcast %90 : vector<16x1xf32> to vector<16x16xf32>
    %92 = arith.subf %88, %91 : vector<16x16xf32>
    %93 = math.exp %92 : vector<16x16xf32>
    %cst_31 = arith.constant dense<0.000000e+00> : vector<16xf32>
    %94 = vector.multi_reduction <add>, %93, %cst_31 [1] : vector<16x16xf32> to vector<16xf32>
    %95 = vector.shape_cast %94 : vector<16xf32> to vector<16x1xf32>
    %96 = tpu.reciprocal %95 {approx = true} : vector<16x1xf32> -> vector<16x1xf32>
    %97 = vector.broadcast %96 : vector<16x1xf32> to vector<16x16xf32>
    %98 = arith.mulf %93, %97 : vector<16x16xf32>
    %99 = arith.truncf %98 : vector<16x16xf32> to vector<16x16xbf16>
    %cst_32 = arith.constant dense<0.000000e+00> : vector<16x8xf32>
    %100 = tpu.matmul %99, %86, %cst_32 {dimension_numbers = #tpu.dot_dimension_numbers<[1], [0], [0], [1], [0, 0, 1, 1], [], []>} : vector<16x16xbf16>, vector<16x8xbf16>, vector<16x8xf32> -> vector<16x8xf32>
    %101 = arith.truncf %100 : vector<16x8xf32> to vector<16x8xbf16>
    %102 = vector.extract_strided_slice %12 {offsets = [24, 0], sizes = [8, 32], strides = [1, 1]} : vector<32x32xbf16> to vector<8x32xbf16>
    %cst_33 = arith.constant dense<0.000000e+00> : vector<16x32xf32>
    %103 = tpu.matmul %101, %102, %cst_33 {dimension_numbers = #tpu.dot_dimension_numbers<[1], [0], [0], [1], [0, 0, 1, 1], [], []>} : vector<16x8xbf16>, vector<8x32xbf16>, vector<16x32xf32> -> vector<16x32xf32>
    %104 = arith.addf %83, %103 : vector<16x32xf32>
    %c0_34 = arith.constant 0 : index
    %c0_35 = arith.constant 0 : index
    %105 = vector.load %arg8[%c0_34, %c0_35] : memref<1x32xf32, #tpu.memory_space<vmem>>, vector<1x32xf32>
    %106 = vector.broadcast %105 : vector<1x32xf32> to vector<16x32xf32>
    %107 = arith.addf %104, %106 : vector<16x32xf32>
    %108 = arith.addf %107, %0 : vector<16x32xf32>
    %c0_36 = arith.constant 0 : index
    %c0_37 = arith.constant 0 : index
    %109 = vector.load %arg9[%c0_36, %c0_37] : memref<1x32xf32, #tpu.memory_space<vmem>>, vector<1x32xf32>
    %c0_38 = arith.constant 0 : index
    %c0_39 = arith.constant 0 : index
    %110 = vector.load %arg10[%c0_38, %c0_39] : memref<1x32xf32, #tpu.memory_space<vmem>>, vector<1x32xf32>
    %cst_40 = arith.constant dense<0.000000e+00> : vector<16xf32>
    %111 = vector.multi_reduction <add>, %108, %cst_40 [1] : vector<16x32xf32> to vector<16xf32>
    %112 = vector.shape_cast %111 : vector<16xf32> to vector<16x1xf32>
    %cst_41 = arith.constant 3.200000e+01 : f32
    %113 = vector.broadcast %cst_41 : f32 to vector<16x1xf32>
    %114 = arith.divf %112, %113 : vector<16x1xf32>
    %115 = vector.broadcast %114 : vector<16x1xf32> to vector<16x32xf32>
    %116 = arith.subf %108, %115 : vector<16x32xf32>
    %117 = arith.mulf %116, %116 : vector<16x32xf32>
    %cst_42 = arith.constant dense<0.000000e+00> : vector<16xf32>
    %118 = vector.multi_reduction <add>, %117, %cst_42 [1] : vector<16x32xf32> to vector<16xf32>
    %119 = vector.shape_cast %118 : vector<16xf32> to vector<16x1xf32>
    %cst_43 = arith.constant 3.200000e+01 : f32
    %120 = vector.broadcast %cst_43 : f32 to vector<16x1xf32>
    %121 = arith.divf %119, %120 : vector<16x1xf32>
    %122 = vector.broadcast %114 : vector<16x1xf32> to vector<16x32xf32>
    %123 = arith.subf %108, %122 : vector<16x32xf32>
    %cst_44 = arith.constant 9.99999996E-13 : f32
    %124 = vector.broadcast %cst_44 : f32 to vector<16x1xf32>
    %125 = arith.addf %121, %124 : vector<16x1xf32>
    %126 = math.rsqrt %125 : vector<16x1xf32>
    %127 = vector.broadcast %126 : vector<16x1xf32> to vector<16x32xf32>
    %128 = arith.mulf %123, %127 : vector<16x32xf32>
    %129 = vector.broadcast %109 : vector<1x32xf32> to vector<16x32xf32>
    %130 = arith.mulf %128, %129 : vector<16x32xf32>
    %131 = vector.broadcast %110 : vector<1x32xf32> to vector<16x32xf32>
    %132 = arith.addf %130, %131 : vector<16x32xf32>
    %133 = arith.truncf %132 : vector<16x32xf32> to vector<16x32xbf16>
    %c0_45 = arith.constant 0 : index
    %c0_46 = arith.constant 0 : index
    %134 = vector.load %arg11[%c0_45, %c0_46] : memref<32x32xbf16, #tpu.memory_space<vmem>>, vector<32x32xbf16>
    %cst_47 = arith.constant dense<0.000000e+00> : vector<16x32xf32>
    %135 = tpu.matmul %133, %134, %cst_47 {dimension_numbers = #tpu.dot_dimension_numbers<[1], [0], [0], [1], [0, 0, 1, 1], [], []>} : vector<16x32xbf16>, vector<32x32xbf16>, vector<16x32xf32> -> vector<16x32xf32>
    %c0_48 = arith.constant 0 : index
    %c0_49 = arith.constant 0 : index
    %136 = vector.load %arg12[%c0_48, %c0_49] : memref<1x32xf32, #tpu.memory_space<vmem>>, vector<1x32xf32>
    %137 = vector.broadcast %136 : vector<1x32xf32> to vector<16x32xf32>
    %138 = arith.addf %135, %137 : vector<16x32xf32>
    %139 = arith.truncf %1 : vector<32x32xf32> to vector<32x32xbf16>
    %c0_50 = arith.constant 0 : index
    %c0_51 = arith.constant 0 : index
    %140 = vector.load %arg13[%c0_50, %c0_51] : memref<32x64xbf16, #tpu.memory_space<vmem>>, vector<32x64xbf16>
    %cst_52 = arith.constant dense<0.000000e+00> : vector<32x64xf32>
    %141 = tpu.matmul %139, %140, %cst_52 {dimension_numbers = #tpu.dot_dimension_numbers<[1], [0], [0], [1], [0, 0, 1, 1], [], []>} : vector<32x32xbf16>, vector<32x64xbf16>, vector<32x64xf32> -> vector<32x64xf32>
    %c0_53 = arith.constant 0 : index
    %c0_54 = arith.constant 0 : index
    %142 = vector.load %arg14[%c0_53, %c0_54] : memref<1x64xf32, #tpu.memory_space<vmem>>, vector<1x64xf32>
    %143 = vector.broadcast %142 : vector<1x64xf32> to vector<32x64xf32>
    %144 = arith.addf %141, %143 : vector<32x64xf32>
    %145 = vector.extract_strided_slice %144 {offsets = [0, 0], sizes = [32, 32], strides = [1, 1]} : vector<32x64xf32> to vector<32x32xf32>
    %146 = vector.extract_strided_slice %144 {offsets = [0, 32], sizes = [32, 32], strides = [1, 1]} : vector<32x64xf32> to vector<32x32xf32>
    %c0_55 = arith.constant 0 : index
    %c0_56 = arith.constant 0 : index
    %147 = vector.load %arg4[%c0_55, %c0_56] : memref<16x32xf32, #tpu.memory_space<vmem>>, vector<16x32xf32>
    %c0_57 = arith.constant 0 : index
    %c0_58 = arith.constant 0 : index
    %148 = vector.load %arg15[%c0_57, %c0_58] : memref<32x32xbf16, #tpu.memory_space<vmem>>, vector<32x32xbf16>
    %cst_59 = arith.constant 8.000000e+00 : f32
    %149 = math.sqrt %cst_59 : f32
    %cst_60 = arith.constant 1.000000e+00 : f32
    %150 = arith.divf %cst_60, %149 : f32
    %151 = vector.broadcast %150 : f32 to vector<16x32xf32>
    %152 = arith.mulf %138, %151 : vector<16x32xf32>
    %153 = arith.truncf %152 : vector<16x32xf32> to vector<16x32xbf16>
    %154 = arith.truncf %145 : vector<32x32xf32> to vector<32x32xbf16>
    %155 = arith.truncf %146 : vector<32x32xf32> to vector<32x32xbf16>
    %cst_61 = arith.constant 0.000000e+00 : f32
    %156 = vector.broadcast %cst_61 : f32 to vector<16x32xf32>
    %157 = vector.extract_strided_slice %153 {offsets = [0, 0], sizes = [16, 8], strides = [1, 1]} : vector<16x32xbf16> to vector<16x8xbf16>
    %158 = vector.extract_strided_slice %154 {offsets = [0, 0], sizes = [32, 8], strides = [1, 1]} : vector<32x32xbf16> to vector<32x8xbf16>
    %159 = vector.extract_strided_slice %155 {offsets = [0, 0], sizes = [32, 8], strides = [1, 1]} : vector<32x32xbf16> to vector<32x8xbf16>
    %cst_62 = arith.constant dense<0.000000e+00> : vector<16x32xf32>
    %160 = tpu.matmul %157, %158, %cst_62 {dimension_numbers = #tpu.dot_dimension_numbers<[1], [1], [0], [0], [0, 0, 1, 0], [], []>} : vector<16x8xbf16>, vector<32x8xbf16>, vector<16x32xf32> -> vector<16x32xf32>
    %161 = arith.addf %160, %147 : vector<16x32xf32>
    %cst_63 = arith.constant dense<0xFF800000> : vector<16xf32>
    %162 = vector.multi_reduction <maximumf>, %161, %cst_63 [1] : vector<16x32xf32> to vector<16xf32>
    %163 = vector.shape_cast %162 : vector<16xf32> to vector<16x1xf32>
    %164 = vector.broadcast %163 : vector<16x1xf32> to vector<16x32xf32>
    %165 = arith.subf %161, %164 : vector<16x32xf32>
    %166 = math.exp %165 : vector<16x32xf32>
    %cst_64 = arith.constant dense<0.000000e+00> : vector<16xf32>
    %167 = vector.multi_reduction <add>, %166, %cst_64 [1] : vector<16x32xf32> to vector<16xf32>
    %168 = vector.shape_cast %167 : vector<16xf32> to vector<16x1xf32>
    %169 = tpu.reciprocal %168 {approx = true} : vector<16x1xf32> -> vector<16x1xf32>
    %170 = vector.broadcast %169 : vector<16x1xf32> to vector<16x32xf32>
    %171 = arith.mulf %166, %170 : vector<16x32xf32>
    %172 = arith.truncf %171 : vector<16x32xf32> to vector<16x32xbf16>
    %cst_65 = arith.constant dense<0.000000e+00> : vector<16x8xf32>
    %173 = tpu.matmul %172, %159, %cst_65 {dimension_numbers = #tpu.dot_dimension_numbers<[1], [0], [0], [1], [0, 0, 1, 1], [], []>} : vector<16x32xbf16>, vector<32x8xbf16>, vector<16x8xf32> -> vector<16x8xf32>
    %174 = arith.truncf %173 : vector<16x8xf32> to vector<16x8xbf16>
    %175 = vector.extract_strided_slice %148 {offsets = [0, 0], sizes = [8, 32], strides = [1, 1]} : vector<32x32xbf16> to vector<8x32xbf16>
    %cst_66 = arith.constant dense<0.000000e+00> : vector<16x32xf32>
    %176 = tpu.matmul %174, %175, %cst_66 {dimension_numbers = #tpu.dot_dimension_numbers<[1], [0], [0], [1], [0, 0, 1, 1], [], []>} : vector<16x8xbf16>, vector<8x32xbf16>, vector<16x32xf32> -> vector<16x32xf32>
    %177 = arith.addf %156, %176 : vector<16x32xf32>
    %178 = vector.extract_strided_slice %153 {offsets = [0, 8], sizes = [16, 8], strides = [1, 1]} : vector<16x32xbf16> to vector<16x8xbf16>
    %179 = vector.extract_strided_slice %154 {offsets = [0, 8], sizes = [32, 8], strides = [1, 1]} : vector<32x32xbf16> to vector<32x8xbf16>
    %180 = vector.extract_strided_slice %155 {offsets = [0, 8], sizes = [32, 8], strides = [1, 1]} : vector<32x32xbf16> to vector<32x8xbf16>
    %cst_67 = arith.constant dense<0.000000e+00> : vector<16x32xf32>
    %181 = tpu.matmul %178, %179, %cst_67 {dimension_numbers = #tpu.dot_dimension_numbers<[1], [1], [0], [0], [0, 0, 1, 0], [], []>} : vector<16x8xbf16>, vector<32x8xbf16>, vector<16x32xf32> -> vector<16x32xf32>
    %182 = arith.addf %181, %147 : vector<16x32xf32>
    %cst_68 = arith.constant dense<0xFF800000> : vector<16xf32>
    %183 = vector.multi_reduction <maximumf>, %182, %cst_68 [1] : vector<16x32xf32> to vector<16xf32>
    %184 = vector.shape_cast %183 : vector<16xf32> to vector<16x1xf32>
    %185 = vector.broadcast %184 : vector<16x1xf32> to vector<16x32xf32>
    %186 = arith.subf %182, %185 : vector<16x32xf32>
    %187 = math.exp %186 : vector<16x32xf32>
    %cst_69 = arith.constant dense<0.000000e+00> : vector<16xf32>
    %188 = vector.multi_reduction <add>, %187, %cst_69 [1] : vector<16x32xf32> to vector<16xf32>
    %189 = vector.shape_cast %188 : vector<16xf32> to vector<16x1xf32>
    %190 = tpu.reciprocal %189 {approx = true} : vector<16x1xf32> -> vector<16x1xf32>
    %191 = vector.broadcast %190 : vector<16x1xf32> to vector<16x32xf32>
    %192 = arith.mulf %187, %191 : vector<16x32xf32>
    %193 = arith.truncf %192 : vector<16x32xf32> to vector<16x32xbf16>
    %cst_70 = arith.constant dense<0.000000e+00> : vector<16x8xf32>
    %194 = tpu.matmul %193, %180, %cst_70 {dimension_numbers = #tpu.dot_dimension_numbers<[1], [0], [0], [1], [0, 0, 1, 1], [], []>} : vector<16x32xbf16>, vector<32x8xbf16>, vector<16x8xf32> -> vector<16x8xf32>
    %195 = arith.truncf %194 : vector<16x8xf32> to vector<16x8xbf16>
    %196 = vector.extract_strided_slice %148 {offsets = [8, 0], sizes = [8, 32], strides = [1, 1]} : vector<32x32xbf16> to vector<8x32xbf16>
    %cst_71 = arith.constant dense<0.000000e+00> : vector<16x32xf32>
    %197 = tpu.matmul %195, %196, %cst_71 {dimension_numbers = #tpu.dot_dimension_numbers<[1], [0], [0], [1], [0, 0, 1, 1], [], []>} : vector<16x8xbf16>, vector<8x32xbf16>, vector<16x32xf32> -> vector<16x32xf32>
    %198 = arith.addf %177, %197 : vector<16x32xf32>
    %199 = vector.extract_strided_slice %153 {offsets = [0, 16], sizes = [16, 8], strides = [1, 1]} : vector<16x32xbf16> to vector<16x8xbf16>
    %200 = vector.extract_strided_slice %154 {offsets = [0, 16], sizes = [32, 8], strides = [1, 1]} : vector<32x32xbf16> to vector<32x8xbf16>
    %201 = vector.extract_strided_slice %155 {offsets = [0, 16], sizes = [32, 8], strides = [1, 1]} : vector<32x32xbf16> to vector<32x8xbf16>
    %cst_72 = arith.constant dense<0.000000e+00> : vector<16x32xf32>
    %202 = tpu.matmul %199, %200, %cst_72 {dimension_numbers = #tpu.dot_dimension_numbers<[1], [1], [0], [0], [0, 0, 1, 0], [], []>} : vector<16x8xbf16>, vector<32x8xbf16>, vector<16x32xf32> -> vector<16x32xf32>
    %203 = arith.addf %202, %147 : vector<16x32xf32>
    %cst_73 = arith.constant dense<0xFF800000> : vector<16xf32>
    %204 = vector.multi_reduction <maximumf>, %203, %cst_73 [1] : vector<16x32xf32> to vector<16xf32>
    %205 = vector.shape_cast %204 : vector<16xf32> to vector<16x1xf32>
    %206 = vector.broadcast %205 : vector<16x1xf32> to vector<16x32xf32>
    %207 = arith.subf %203, %206 : vector<16x32xf32>
    %208 = math.exp %207 : vector<16x32xf32>
    %cst_74 = arith.constant dense<0.000000e+00> : vector<16xf32>
    %209 = vector.multi_reduction <add>, %208, %cst_74 [1] : vector<16x32xf32> to vector<16xf32>
    %210 = vector.shape_cast %209 : vector<16xf32> to vector<16x1xf32>
    %211 = tpu.reciprocal %210 {approx = true} : vector<16x1xf32> -> vector<16x1xf32>
    %212 = vector.broadcast %211 : vector<16x1xf32> to vector<16x32xf32>
    %213 = arith.mulf %208, %212 : vector<16x32xf32>
    %214 = arith.truncf %213 : vector<16x32xf32> to vector<16x32xbf16>
    %cst_75 = arith.constant dense<0.000000e+00> : vector<16x8xf32>
    %215 = tpu.matmul %214, %201, %cst_75 {dimension_numbers = #tpu.dot_dimension_numbers<[1], [0], [0], [1], [0, 0, 1, 1], [], []>} : vector<16x32xbf16>, vector<32x8xbf16>, vector<16x8xf32> -> vector<16x8xf32>
    %216 = arith.truncf %215 : vector<16x8xf32> to vector<16x8xbf16>
    %217 = vector.extract_strided_slice %148 {offsets = [16, 0], sizes = [8, 32], strides = [1, 1]} : vector<32x32xbf16> to vector<8x32xbf16>
    %cst_76 = arith.constant dense<0.000000e+00> : vector<16x32xf32>
    %218 = tpu.matmul %216, %217, %cst_76 {dimension_numbers = #tpu.dot_dimension_numbers<[1], [0], [0], [1], [0, 0, 1, 1], [], []>} : vector<16x8xbf16>, vector<8x32xbf16>, vector<16x32xf32> -> vector<16x32xf32>
    %219 = arith.addf %198, %218 : vector<16x32xf32>
    %220 = vector.extract_strided_slice %153 {offsets = [0, 24], sizes = [16, 8], strides = [1, 1]} : vector<16x32xbf16> to vector<16x8xbf16>
    %221 = vector.extract_strided_slice %154 {offsets = [0, 24], sizes = [32, 8], strides = [1, 1]} : vector<32x32xbf16> to vector<32x8xbf16>
    %222 = vector.extract_strided_slice %155 {offsets = [0, 24], sizes = [32, 8], strides = [1, 1]} : vector<32x32xbf16> to vector<32x8xbf16>
    %cst_77 = arith.constant dense<0.000000e+00> : vector<16x32xf32>
    %223 = tpu.matmul %220, %221, %cst_77 {dimension_numbers = #tpu.dot_dimension_numbers<[1], [1], [0], [0], [0, 0, 1, 0], [], []>} : vector<16x8xbf16>, vector<32x8xbf16>, vector<16x32xf32> -> vector<16x32xf32>
    %224 = arith.addf %223, %147 : vector<16x32xf32>
    %cst_78 = arith.constant dense<0xFF800000> : vector<16xf32>
    %225 = vector.multi_reduction <maximumf>, %224, %cst_78 [1] : vector<16x32xf32> to vector<16xf32>
    %226 = vector.shape_cast %225 : vector<16xf32> to vector<16x1xf32>
    %227 = vector.broadcast %226 : vector<16x1xf32> to vector<16x32xf32>
    %228 = arith.subf %224, %227 : vector<16x32xf32>
    %229 = math.exp %228 : vector<16x32xf32>
    %cst_79 = arith.constant dense<0.000000e+00> : vector<16xf32>
    %230 = vector.multi_reduction <add>, %229, %cst_79 [1] : vector<16x32xf32> to vector<16xf32>
    %231 = vector.shape_cast %230 : vector<16xf32> to vector<16x1xf32>
    %232 = tpu.reciprocal %231 {approx = true} : vector<16x1xf32> -> vector<16x1xf32>
    %233 = vector.broadcast %232 : vector<16x1xf32> to vector<16x32xf32>
    %234 = arith.mulf %229, %233 : vector<16x32xf32>
    %235 = arith.truncf %234 : vector<16x32xf32> to vector<16x32xbf16>
    %cst_80 = arith.constant dense<0.000000e+00> : vector<16x8xf32>
    %236 = tpu.matmul %235, %222, %cst_80 {dimension_numbers = #tpu.dot_dimension_numbers<[1], [0], [0], [1], [0, 0, 1, 1], [], []>} : vector<16x32xbf16>, vector<32x8xbf16>, vector<16x8xf32> -> vector<16x8xf32>
    %237 = arith.truncf %236 : vector<16x8xf32> to vector<16x8xbf16>
    %238 = vector.extract_strided_slice %148 {offsets = [24, 0], sizes = [8, 32], strides = [1, 1]} : vector<32x32xbf16> to vector<8x32xbf16>
    %cst_81 = arith.constant dense<0.000000e+00> : vector<16x32xf32>
    %239 = tpu.matmul %237, %238, %cst_81 {dimension_numbers = #tpu.dot_dimension_numbers<[1], [0], [0], [1], [0, 0, 1, 1], [], []>} : vector<16x8xbf16>, vector<8x32xbf16>, vector<16x32xf32> -> vector<16x32xf32>
    %240 = arith.addf %219, %239 : vector<16x32xf32>
    %c0_82 = arith.constant 0 : index
    %c0_83 = arith.constant 0 : index
    %241 = vector.load %arg16[%c0_82, %c0_83] : memref<1x32xf32, #tpu.memory_space<vmem>>, vector<1x32xf32>
    %242 = vector.broadcast %241 : vector<1x32xf32> to vector<16x32xf32>
    %243 = arith.addf %240, %242 : vector<16x32xf32>
    %244 = arith.addf %243, %132 : vector<16x32xf32>
    %c0_84 = arith.constant 0 : index
    %c0_85 = arith.constant 0 : index
    %245 = vector.load %arg17[%c0_84, %c0_85] : memref<1x32xf32, #tpu.memory_space<vmem>>, vector<1x32xf32>
    %c0_86 = arith.constant 0 : index
    %c0_87 = arith.constant 0 : index
    %246 = vector.load %arg18[%c0_86, %c0_87] : memref<1x32xf32, #tpu.memory_space<vmem>>, vector<1x32xf32>
    %cst_88 = arith.constant dense<0.000000e+00> : vector<16xf32>
    %247 = vector.multi_reduction <add>, %244, %cst_88 [1] : vector<16x32xf32> to vector<16xf32>
    %248 = vector.shape_cast %247 : vector<16xf32> to vector<16x1xf32>
    %cst_89 = arith.constant 3.200000e+01 : f32
    %249 = vector.broadcast %cst_89 : f32 to vector<16x1xf32>
    %250 = arith.divf %248, %249 : vector<16x1xf32>
    %251 = vector.broadcast %250 : vector<16x1xf32> to vector<16x32xf32>
    %252 = arith.subf %244, %251 : vector<16x32xf32>
    %253 = arith.mulf %252, %252 : vector<16x32xf32>
    %cst_90 = arith.constant dense<0.000000e+00> : vector<16xf32>
    %254 = vector.multi_reduction <add>, %253, %cst_90 [1] : vector<16x32xf32> to vector<16xf32>
    %255 = vector.shape_cast %254 : vector<16xf32> to vector<16x1xf32>
    %cst_91 = arith.constant 3.200000e+01 : f32
    %256 = vector.broadcast %cst_91 : f32 to vector<16x1xf32>
    %257 = arith.divf %255, %256 : vector<16x1xf32>
    %258 = vector.broadcast %250 : vector<16x1xf32> to vector<16x32xf32>
    %259 = arith.subf %244, %258 : vector<16x32xf32>
    %cst_92 = arith.constant 9.99999996E-13 : f32
    %260 = vector.broadcast %cst_92 : f32 to vector<16x1xf32>
    %261 = arith.addf %257, %260 : vector<16x1xf32>
    %262 = math.rsqrt %261 : vector<16x1xf32>
    %263 = vector.broadcast %262 : vector<16x1xf32> to vector<16x32xf32>
    %264 = arith.mulf %259, %263 : vector<16x32xf32>
    %265 = vector.broadcast %245 : vector<1x32xf32> to vector<16x32xf32>
    %266 = arith.mulf %264, %265 : vector<16x32xf32>
    %267 = vector.broadcast %246 : vector<1x32xf32> to vector<16x32xf32>
    %268 = arith.addf %266, %267 : vector<16x32xf32>
    %269 = arith.truncf %268 : vector<16x32xf32> to vector<16x32xbf16>
    %c0_93 = arith.constant 0 : index
    %c0_94 = arith.constant 0 : index
    %270 = vector.load %arg19[%c0_93, %c0_94] : memref<32x64xbf16, #tpu.memory_space<vmem>>, vector<32x64xbf16>
    %cst_95 = arith.constant dense<0.000000e+00> : vector<16x64xf32>
    %271 = tpu.matmul %269, %270, %cst_95 {dimension_numbers = #tpu.dot_dimension_numbers<[1], [0], [0], [1], [0, 0, 1, 1], [], []>} : vector<16x32xbf16>, vector<32x64xbf16>, vector<16x64xf32> -> vector<16x64xf32>
    %c0_96 = arith.constant 0 : index
    %c0_97 = arith.constant 0 : index
    %272 = vector.load %arg20[%c0_96, %c0_97] : memref<1x64xf32, #tpu.memory_space<vmem>>, vector<1x64xf32>
    %273 = vector.broadcast %272 : vector<1x64xf32> to vector<16x64xf32>
    %274 = arith.addf %271, %273 : vector<16x64xf32>
    %cst_98 = arith.constant 0.000000e+00 : f32
    %275 = vector.broadcast %cst_98 : f32 to vector<16x64xf32>
    %276 = arith.maximumf %274, %275 : vector<16x64xf32>
    %277 = arith.truncf %276 : vector<16x64xf32> to vector<16x64xbf16>
    %c0_99 = arith.constant 0 : index
    %c0_100 = arith.constant 0 : index
    %278 = vector.load %arg21[%c0_99, %c0_100] : memref<64x32xbf16, #tpu.memory_space<vmem>>, vector<64x32xbf16>
    %cst_101 = arith.constant dense<0.000000e+00> : vector<16x32xf32>
    %279 = tpu.matmul %277, %278, %cst_101 {dimension_numbers = #tpu.dot_dimension_numbers<[1], [0], [0], [1], [0, 0, 1, 1], [], []>} : vector<16x64xbf16>, vector<64x32xbf16>, vector<16x32xf32> -> vector<16x32xf32>
    %c0_102 = arith.constant 0 : index
    %c0_103 = arith.constant 0 : index
    %280 = vector.load %arg22[%c0_102, %c0_103] : memref<1x32xf32, #tpu.memory_space<vmem>>, vector<1x32xf32>
    %281 = vector.broadcast %280 : vector<1x32xf32> to vector<16x32xf32>
    %282 = arith.addf %279, %281 : vector<16x32xf32>
    %283 = arith.addf %282, %268 : vector<16x32xf32>
    %c0_104 = arith.constant 0 : index
    %c0_105 = arith.constant 0 : index
    %284 = vector.load %arg23[%c0_104, %c0_105] : memref<1x32xf32, #tpu.memory_space<vmem>>, vector<1x32xf32>
    %c0_106 = arith.constant 0 : index
    %c0_107 = arith.constant 0 : index
    %285 = vector.load %arg24[%c0_106, %c0_107] : memref<1x32xf32, #tpu.memory_space<vmem>>, vector<1x32xf32>
    %cst_108 = arith.constant dense<0.000000e+00> : vector<16xf32>
    %286 = vector.multi_reduction <add>, %283, %cst_108 [1] : vector<16x32xf32> to vector<16xf32>
    %287 = vector.shape_cast %286 : vector<16xf32> to vector<16x1xf32>
    %cst_109 = arith.constant 3.200000e+01 : f32
    %288 = vector.broadcast %cst_109 : f32 to vector<16x1xf32>
    %289 = arith.divf %287, %288 : vector<16x1xf32>
    %290 = vector.broadcast %289 : vector<16x1xf32> to vector<16x32xf32>
    %291 = arith.subf %283, %290 : vector<16x32xf32>
    %292 = arith.mulf %291, %291 : vector<16x32xf32>
    %cst_110 = arith.constant dense<0.000000e+00> : vector<16xf32>
    %293 = vector.multi_reduction <add>, %292, %cst_110 [1] : vector<16x32xf32> to vector<16xf32>
    %294 = vector.shape_cast %293 : vector<16xf32> to vector<16x1xf32>
    %cst_111 = arith.constant 3.200000e+01 : f32
    %295 = vector.broadcast %cst_111 : f32 to vector<16x1xf32>
    %296 = arith.divf %294, %295 : vector<16x1xf32>
    %297 = vector.broadcast %289 : vector<16x1xf32> to vector<16x32xf32>
    %298 = arith.subf %283, %297 : vector<16x32xf32>
    %cst_112 = arith.constant 9.99999996E-13 : f32
    %299 = vector.broadcast %cst_112 : f32 to vector<16x1xf32>
    %300 = arith.addf %296, %299 : vector<16x1xf32>
    %301 = math.rsqrt %300 : vector<16x1xf32>
    %302 = vector.broadcast %301 : vector<16x1xf32> to vector<16x32xf32>
    %303 = arith.mulf %298, %302 : vector<16x32xf32>
    %304 = vector.broadcast %284 : vector<1x32xf32> to vector<16x32xf32>
    %305 = arith.mulf %303, %304 : vector<16x32xf32>
    %306 = vector.broadcast %285 : vector<1x32xf32> to vector<16x32xf32>
    %307 = arith.addf %305, %306 : vector<16x32xf32>
    %c0_113 = arith.constant 0 : index
    %c0_114 = arith.constant 0 : index
    %308 = vector.load %arg25[%c0_113, %c0_114] : memref<16x32xf32, #tpu.memory_space<vmem>>, vector<16x32xf32>
    tpu.vector_store %arg25[%c0_113, %c0_114], %307 {strides = array<i32>} : memref<16x32xf32, #tpu.memory_space<vmem>>, vector<16x32xf32>,
    return
  }
  func.func @transform_0(%arg0: i32) -> (i32, i32) {
    %c0_i32 = arith.constant 0 : i32
    %c0_i32_0 = arith.constant 0 : i32
    %c0_i32_1 = arith.constant 0 : i32
    return %c0_i32, %c0_i32_0 : i32, i32
  }
  func.func @transform_1(%arg0: i32) -> (i32, i32) {
    %c0_i32 = arith.constant 0 : i32
    %c0_i32_0 = arith.constant 0 : i32
    %c0_i32_1 = arith.constant 0 : i32
    return %c0_i32, %c0_i32_0 : i32, i32
  }
  func.func @transform_2(%arg0: i32) -> (i32, i32) {
    %c0_i32 = arith.constant 0 : i32
    %c0_i32_0 = arith.constant 0 : i32
    %c0_i32_1 = arith.constant 0 : i32
    return %c0_i32, %c0_i32_0 : i32, i32
  }
  func.func @transform_3(%arg0: i32) -> (i32, i32) {
    %c0_i32 = arith.constant 0 : i32
    %c0_i32_0 = arith.constant 0 : i32
    %c0_i32_1 = arith.constant 0 : i32
    return %c0_i32, %c0_i32_0 : i32, i32
  }
  func.func @transform_4(%arg0: i32) -> (i32, i32) {
    %c0_i32 = arith.constant 0 : i32
    %c0_i32_0 = arith.constant 0 : i32
    %c0_i32_1 = arith.constant 0 : i32
    return %c0_i32, %c0_i32_0 : i32, i32
  }
  func.func @transform_5(%arg0: i32) -> (i32, i32) {
    %c0_i32 = arith.constant 0 : i32
    %c0_i32_0 = arith.constant 0 : i32
    %c0_i32_1 = arith.constant 0 : i32
    return %c0_i32, %c0_i32_0 : i32, i32
  }
  func.func @transform_6(%arg0: i32) -> (i32, i32) {
    %c0_i32 = arith.constant 0 : i32
    %c0_i32_0 = arith.constant 0 : i32
    %c0_i32_1 = arith.constant 0 : i32
    return %c0_i32, %c0_i32_0 : i32, i32
  }
  func.func @transform_7(%arg0: i32) -> (i32, i32) {
    %c0_i32 = arith.constant 0 : i32
    %c0_i32_0 = arith.constant 0 : i32
    %c0_i32_1 = arith.constant 0 : i32
    return %c0_i32, %c0_i32_0 : i32, i32
  }
  func.func @transform_8(%arg0: i32) -> (i32, i32) {
    %c0_i32 = arith.constant 0 : i32
    %c0_i32_0 = arith.constant 0 : i32
    %c0_i32_1 = arith.constant 0 : i32
    return %c0_i32, %c0_i32_0 : i32, i32
  }
  func.func @transform_9(%arg0: i32) -> (i32, i32) {
    %c0_i32 = arith.constant 0 : i32
    %c0_i32_0 = arith.constant 0 : i32
    %c0_i32_1 = arith.constant 0 : i32
    return %c0_i32, %c0_i32_0 : i32, i32
  }
  func.func @transform_10(%arg0: i32) -> (i32, i32) {
    %c0_i32 = arith.constant 0 : i32
    %c0_i32_0 = arith.constant 0 : i32
    %c0_i32_1 = arith.constant 0 : i32
    return %c0_i32, %c0_i32_0 : i32, i32
  }
  func.func @transform_11(%arg0: i32) -> (i32, i32) {
    %c0_i32 = arith.constant 0 : i32
    %c0_i32_0 = arith.constant 0 : i32
    %c0_i32_1 = arith.constant 0 : i32
    return %c0_i32, %c0_i32_0 : i32, i32
  }
  func.func @transform_12(%arg0: i32) -> (i32, i32) {
    %c0_i32 = arith.constant 0 : i32
    %c0_i32_0 = arith.constant 0 : i32
    %c0_i32_1 = arith.constant 0 : i32
    return %c0_i32, %c0_i32_0 : i32, i32
  }
  func.func @transform_13(%arg0: i32) -> (i32, i32) {
    %c0_i32 = arith.constant 0 : i32
    %c0_i32_0 = arith.constant 0 : i32
    %c0_i32_1 = arith.constant 0 : i32
    return %c0_i32, %c0_i32_0 : i32, i32
  }
  func.func @transform_14(%arg0: i32) -> (i32, i32) {
    %c0_i32 = arith.constant 0 : i32
    %c0_i32_0 = arith.constant 0 : i32
    %c0_i32_1 = arith.constant 0 : i32
    return %c0_i32, %c0_i32_0 : i32, i32
  }
  func.func @transform_15(%arg0: i32) -> (i32, i32) {
    %c0_i32 = arith.constant 0 : i32
    %c0_i32_0 = arith.constant 0 : i32
    %c0_i32_1 = arith.constant 0 : i32
    return %c0_i32, %c0_i32_0 : i32, i32
  }
  func.func @transform_16(%arg0: i32) -> (i32, i32) {
    %c0_i32 = arith.constant 0 : i32
    %c0_i32_0 = arith.constant 0 : i32
    %c0_i32_1 = arith.constant 0 : i32
    return %c0_i32, %c0_i32_0 : i32, i32
  }
  func.func @transform_17(%arg0: i32) -> (i32, i32) {
    %c0_i32 = arith.constant 0 : i32
    %c0_i32_0 = arith.constant 0 : i32
    %c0_i32_1 = arith.constant 0 : i32
    return %c0_i32, %c0_i32_0 : i32, i32
  }
  func.func @transform_18(%arg0: i32) -> (i32, i32) {
    %c0_i32 = arith.constant 0 : i32
    %c0_i32_0 = arith.constant 0 : i32
    %c0_i32_1 = arith.constant 0 : i32
    return %c0_i32, %c0_i32_0 : i32, i32
  }
  func.func @transform_19(%arg0: i32) -> (i32, i32) {
    %c0_i32 = arith.constant 0 : i32
    %c0_i32_0 = arith.constant 0 : i32
    %c0_i32_1 = arith.constant 0 : i32
    return %c0_i32, %c0_i32_0 : i32, i32
  }
  func.func @transform_20(%arg0: i32) -> (i32, i32) {
    %c0_i32 = arith.constant 0 : i32
    %c0_i32_0 = arith.constant 0 : i32
    %c0_i32_1 = arith.constant 0 : i32
    return %c0_i32, %c0_i32_0 : i32, i32
  }
  func.func @transform_21(%arg0: i32) -> (i32, i32) {
    %c0_i32 = arith.constant 0 : i32
    %c0_i32_0 = arith.constant 0 : i32
    %c0_i32_1 = arith.constant 0 : i32
    return %c0_i32, %c0_i32_0 : i32, i32
  }
  func.func @transform_22(%arg0: i32) -> (i32, i32) {
    %c0_i32 = arith.constant 0 : i32
    %c0_i32_0 = arith.constant 0 : i32
    %c0_i32_1 = arith.constant 0 : i32
    return %c0_i32, %c0_i32_0 : i32, i32
  }
  func.func @transform_23(%arg0: i32) -> (i32, i32) {
    %c0_i32 = arith.constant 0 : i32
    %c0_i32_0 = arith.constant 0 : i32
    %c0_i32_1 = arith.constant 0 : i32
    return %c0_i32, %c0_i32_0 : i32, i32
  }
  func.func @transform_24(%arg0: i32) -> (i32, i32) {
    %c0_i32 = arith.constant 0 : i32
    %c0_i32_0 = arith.constant 0 : i32
    %c0_i32_1 = arith.constant 0 : i32
    return %c0_i32, %c0_i32_0 : i32, i32
  }
}

</mosaic_0001>

<llo_original>
// kernel: tpu_custom_call.1
$region0: #{tpu_custom_call.1}
  #allocation0 [shape = 'u32[]', space=smem, size = 0x4, offset = 0x4, fixed_abs, tag = 'smem constant byte address 0x4 - core index']
  #allocation1 [shape = 'u32[72,128]{1,0:T(1,128)}', space=vmem, size = 0x9000, scoped, tag = 'internal scratch']
  %s0 = inlined_call_operand.vmem [shape: f32[16,32], index: 0, kind: input, shape index: {}]
  %s1 = inlined_call_operand.vmem [shape: f32[32,32], index: 1, kind: input, shape index: {}]
  %s2 = inlined_call_operand.hbm [shape: f32[16,16], index: 2, kind: input, shape index: {}]
  %s3 = inlined_call_operand.hbm [shape: f32[16,32], index: 3, kind: input, shape index: {}]
  %s4 = inlined_call_operand.hbm [shape: bf16[32,96], index: 4, kind: input, shape index: {}]
  %s5 = inlined_call_operand.vmem [shape: f32[1,96], index: 5, kind: input, shape index: {}]
  %s6 = inlined_call_operand.hbm [shape: bf16[32,32], index: 6, kind: input, shape index: {}]
  %s7 = inlined_call_operand.vmem [shape: f32[1,32], index: 7, kind: input, shape index: {}]
  %s8 = inlined_call_operand.vmem [shape: f32[1,32], index: 8, kind: input, shape index: {}]
  %s9 = inlined_call_operand.hbm [shape: f32[1,32], index: 9, kind: input, shape index: {}]
  %s10 = inlined_call_operand.hbm [shape: bf16[32,32], index: 10, kind: input, shape index: {}]
  %s11 = inlined_call_operand.hbm [shape: f32[1,32], index: 11, kind: input, shape index: {}]
  %s12 = inlined_call_operand.hbm [shape: bf16[32,64], index: 12, kind: input, shape index: {}]
  %s13 = inlined_call_operand.hbm [shape: f32[1,64], index: 13, kind: input, shape index: {}]
  %s14 = inlined_call_operand.hbm [shape: bf16[32,32], index: 14, kind: input, shape index: {}]
  %s15 = inlined_call_operand.hbm [shape: f32[1,32], index: 15, kind: input, shape index: {}]
  %s16 = inlined_call_operand.hbm [shape: f32[1,32], index: 16, kind: input, shape index: {}]
  %s17 = inlined_call_operand.hbm [shape: f32[1,32], index: 17, kind: input, shape index: {}]
  %s18 = inlined_call_operand.hbm [shape: bf16[32,64], index: 18, kind: input, shape index: {}]
  %s19 = inlined_call_operand.hbm [shape: f32[1,64], index: 19, kind: input, shape index: {}]
  %s20 = inlined_call_operand.vmem [shape: bf16[64,32], index: 20, kind: input, shape index: {}]
  %s21 = inlined_call_operand.vmem [shape: f32[1,32], index: 21, kind: input, shape index: {}]
  %s22 = inlined_call_operand.vmem [shape: f32[1,32], index: 22, kind: input, shape index: {}]
  %s23 = inlined_call_operand.vmem [shape: f32[1,32], index: 23, kind: input, shape index: {}]
  %s24 = inlined_call_operand.hbm [shape: f32[16,32], index: 24, kind: output, shape index: {}]
  %s25 = sld [smem:[#allocation0]]
  $region166: #{tpu_custom_call.1} parent=0
    _
  %s27 = ssub.s32 1, %s25
  %s28 = scalar_select 0, %s27, %s25
  $region1: #{tpu_custom_call.1} parent=0
    #allocation2 [shape = 'u8[8192]{0}', space=vmem, size = 0x2000, scoped, tag = 'input window, operand 2, single buffered']
    #allocation3 [shape = 's32[1]{0}', space=sflag, size = 0x4, scoped, tag = 'scoped memory for tpu_custom_call.1']
    #allocation4 [shape = 's32[1]{0}', space=sflag, size = 0x4, scoped, tag = 'scoped memory for tpu_custom_call.1']
    #allocation5 [shape = 'u8[8192]{0}', space=vmem, size = 0x2000, scoped, tag = 'input window, operand 3, single buffered']
    #allocation6 [shape = 's32[1]{0}', space=sflag, size = 0x4, scoped, tag = 'scoped memory for tpu_custom_call.1']
    #allocation7 [shape = 'u8[8192]{0}', space=vmem, size = 0x2000, scoped, tag = 'input window, operand 4, single buffered']
    #allocation8 [shape = 'u8[8192]{0}', space=vmem, size = 0x2000, scoped, tag = 'input window, operand 6, single buffered']
    #allocation9 [shape = 's32[1]{0}', space=sflag, size = 0x4, scoped, tag = 'scoped memory for tpu_custom_call.1']
    #allocation10 [shape = 'u8[512]{0}', space=vmem, size = 0x400, scoped, tag = 'input window, operand 9, single buffered']
    #allocation11 [shape = 'u8[8192]{0}', space=vmem, size = 0x2000, scoped, tag = 'input window, operand 10, single buffered']
    #allocation12 [shape = 's32[1]{0}', space=sflag, size = 0x4, scoped, tag = 'scoped memory for tpu_custom_call.1']
    #allocation13 [shape = 'u8[512]{0}', space=vmem, size = 0x400, scoped, tag = 'input window, operand 11, single buffered']
    #allocation14 [shape = 'u8[8192]{0}', space=vmem, size = 0x2000, scoped, tag = 'input window, operand 12, single buffered']
    #allocation15 [shape = 's32[1]{0}', space=sflag, size = 0x4, scoped, tag = 'scoped memory for tpu_custom_call.1']
    #allocation16 [shape = 'u8[512]{0}', space=vmem, size = 0x400, scoped, tag = 'input window, operand 13, single buffered']
    #allocation17 [shape = 'u8[8192]{0}', space=vmem, size = 0x2000, scoped, tag = 'input window, operand 14, single buffered']
    #allocation18 [shape = 's32[1]{0}', space=sflag, size = 0x4, scoped, tag = 'scoped memory for tpu_custom_call.1']
    #allocation19 [shape = 'u8[512]{0}', space=vmem, size = 0x400, scoped, tag = 'input window, operand 15, single buffered']
    #allocation20 [shape = 'u8[512]{0}', space=vmem, size = 0x400, scoped, tag = 'input window, operand 16, single buffered']
    #allocation21 [shape = 's32[1]{0}', space=sflag, size = 0x4, scoped, tag = 'scoped memory for tpu_custom_call.1']
    #allocation22 [shape = 'u8[512]{0}', space=vmem, size = 0x400, scoped, tag = 'input window, operand 17, single buffered']
    #allocation23 [shape = 'u8[8192]{0}', space=vmem, size = 0x2000, scoped, tag = 'input window, operand 18, single buffered']
    #allocation24 [shape = 's32[1]{0}', space=sflag, size = 0x4, scoped, tag = 'scoped memory for tpu_custom_call.1']
    #allocation25 [shape = 'u8[512]{0}', space=vmem, size = 0x400, scoped, tag = 'input window, operand 19, single buffered']
    #allocation26 [shape = 'u8[8192]{0}', space=vmem, size = 0x2000, scoped, tag = 'output window, operand 0, single buffered']
    %29 = vsyncpa [#allocation3], 0
    %30 = vsyncpa [#allocation6], 0
    %31 = vsyncpa [#allocation9], 0
    %32 = vsyncpa [#allocation12], 0
    %33 = vsyncpa [#allocation15], 0
    %34 = vsyncpa [#allocation18], 0
    %35 = vsyncpa [#allocation21], 0
    %36 = vsyncpa [#allocation24], 0
    %37 = vsyncpa [#allocation4], 0
    // Predicated region
    $region2: #{tpu_custom_call.1} parent=1 // pred_check
      _
    $region3: #{tpu_custom_call.1} parent=1 // pred_check_branch
      %39 = sbr.rel (0) target = $region5
    $region4: #{tpu_custom_call.1} parent=1 // pred_region
      _
    $region5: #{tpu_custom_call.1} parent=1 // pred_fallthru
      _
    // Predicated region
    $region6: #{tpu_custom_call.1} parent=1 // pred_check
      _
    $region7: #{tpu_custom_call.1} parent=1 // pred_check_branch
      %41 = sbr.rel (0) target = $region9
    $region8: #{tpu_custom_call.1} parent=1 // pred_region
      _
    $region9: #{tpu_custom_call.1} parent=1 // pred_fallthru
      _
    // Predicated region
    $region10: #{tpu_custom_call.1} parent=1 // pred_check
      _
    $region11: #{tpu_custom_call.1} parent=1 // pred_check_branch
      %43 = sbr.rel (0) target = $region13
    $region12: #{tpu_custom_call.1} parent=1 // pred_region
      %45 = vsyncadd [#allocation3], 0
      %s46 = sshll.u32 %s2, 4
      %s47 = int_to_ptr.hbm [resolvable:$true] %s46
      %s48 = sshll.u32 [#allocation2], 4
      %s49 = int_to_ptr.vmem [resolvable:$true] %s48
      %54 = dma.hbm_to_vmem [thread:$0]  %s47, 256, %s49, [#allocation3], 128, 128, 8
    $region13: #{tpu_custom_call.1} parent=1 // pred_fallthru
      _
    // Predicated region
    $region14: #{tpu_custom_call.1} parent=1 // pred_check
      _
    $region15: #{tpu_custom_call.1} parent=1 // pred_check_branch
      %56 = sbr.rel (0) target = $region17
    $region16: #{tpu_custom_call.1} parent=1 // pred_region
      %58 = vsyncadd [#allocation6], 0
      %s59 = sshll.u32 %s3, 4
      %s60 = int_to_ptr.hbm [resolvable:$true] %s59
      %s61 = sshll.u32 [#allocation5], 4
      %s62 = int_to_ptr.vmem [resolvable:$true] %s61
      %67 = dma.hbm_to_vmem [thread:$0]  %s60, 256, %s62, [#allocation6], 128, 128, 8
    $region17: #{tpu_custom_call.1} parent=1 // pred_fallthru
      _
    // Predicated region
    $region18: #{tpu_custom_call.1} parent=1 // pred_check
      _
    $region19: #{tpu_custom_call.1} parent=1 // pred_check_branch
      %69 = sbr.rel (0) target = $region21
    $region20: #{tpu_custom_call.1} parent=1 // pred_region
      %71 = vsyncadd [#allocation6], 0
      %s72 = sshll.u32 %s4, 4
      %s73 = int_to_ptr.hbm [resolvable:$true] %s72
      %s74 = sshll.u32 [#allocation7], 4
      %s75 = int_to_ptr.vmem [resolvable:$true] %s74
      %80 = dma.hbm_to_vmem [thread:$0]  %s73, 256, %s75, [#allocation6], 64, 64, 4
    $region21: #{tpu_custom_call.1} parent=1 // pred_fallthru
      _
    // Predicated region
    $region22: #{tpu_custom_call.1} parent=1 // pred_check
      _
    $region23: #{tpu_custom_call.1} parent=1 // pred_check_branch
      %82 = sbr.rel (0) target = $region25
    $region24: #{tpu_custom_call.1} parent=1 // pred_region
      _
    $region25: #{tpu_custom_call.1} parent=1 // pred_fallthru
      _
    // Predicated region
    $region26: #{tpu_custom_call.1} parent=1 // pred_check
      _
    $region27: #{tpu_custom_call.1} parent=1 // pred_check_branch
      %84 = sbr.rel (0) target = $region29
    $region28: #{tpu_custom_call.1} parent=1 // pred_region
      %86 = vsyncadd [#allocation9], 0
      %s87 = sshll.u32 %s6, 4
      %s88 = int_to_ptr.hbm [resolvable:$true] %s87
      %s89 = sshll.u32 [#allocation8], 4
      %s90 = int_to_ptr.vmem [resolvable:$true] %s89
      %95 = dma.hbm_to_vmem [thread:$0]  %s88, 256, %s90, [#allocation9], 64, 64, 4
    $region29: #{tpu_custom_call.1} parent=1 // pred_fallthru
      _
    // Predicated region
    $region30: #{tpu_custom_call.1} parent=1 // pred_check
      _
    $region31: #{tpu_custom_call.1} parent=1 // pred_check_branch
      %97 = sbr.rel (0) target = $region33
    $region32: #{tpu_custom_call.1} parent=1 // pred_region
      _
    $region33: #{tpu_custom_call.1} parent=1 // pred_fallthru
      _
    // Predicated region
    $region34: #{tpu_custom_call.1} parent=1 // pred_check
      _
    $region35: #{tpu_custom_call.1} parent=1 // pred_check_branch
      %99 = sbr.rel (0) target = $region37
    $region36: #{tpu_custom_call.1} parent=1 // pred_region
      _
    $region37: #{tpu_custom_call.1} parent=1 // pred_fallthru
      _
    // Predicated region
    $region38: #{tpu_custom_call.1} parent=1 // pred_check
      _
    $region39: #{tpu_custom_call.1} parent=1 // pred_check_branch
      %101 = sbr.rel (0) target = $region41
    $region40: #{tpu_custom_call.1} parent=1 // pred_region
      %103 = vsyncadd [#allocation9], 0
      %s105 = sshll.u32 %s9, 4
      %s106 = int_to_ptr.hbm [resolvable:$true] %s105
      %s107 = sshll.u32 [#allocation10], 4
      %s108 = int_to_ptr.vmem [resolvable:$true] %s107
      %110 = dma.hbm_to_vmem [thread:$0]  %s106, 16, %s108, [#allocation9]
    $region41: #{tpu_custom_call.1} parent=1 // pred_fallthru
      _
    // Predicated region
    $region42: #{tpu_custom_call.1} parent=1 // pred_check
      _
    $region43: #{tpu_custom_call.1} parent=1 // pred_check_branch
      %112 = sbr.rel (0) target = $region45
    $region44: #{tpu_custom_call.1} parent=1 // pred_region
      %114 = vsyncadd [#allocation12], 0
      %s115 = sshll.u32 %s10, 4
      %s116 = int_to_ptr.hbm [resolvable:$true] %s115
      %s117 = sshll.u32 [#allocation11], 4
      %s118 = int_to_ptr.vmem [resolvable:$true] %s117
      %123 = dma.hbm_to_vmem [thread:$0]  %s116, 256, %s118, [#allocation12], 64, 64, 4
    $region45: #{tpu_custom_call.1} parent=1 // pred_fallthru
      _
    // Predicated region
    $region46: #{tpu_custom_call.1} parent=1 // pred_check
      _
    $region47: #{tpu_custom_call.1} parent=1 // pred_check_branch
      %125 = sbr.rel (0) target = $region49
    $region48: #{tpu_custom_call.1} parent=1 // pred_region
      %127 = vsyncadd [#allocation12], 0
      %s129 = sshll.u32 %s11, 4
      %s130 = int_to_ptr.hbm [resolvable:$true] %s129
      %s131 = sshll.u32 [#allocation13], 4
      %s132 = int_to_ptr.vmem [resolvable:$true] %s131
      %134 = dma.hbm_to_vmem [thread:$0]  %s130, 16, %s132, [#allocation12]
    $region49: #{tpu_custom_call.1} parent=1 // pred_fallthru
      _
    // Predicated region
    $region50: #{tpu_custom_call.1} parent=1 // pred_check
      _
    $region51: #{tpu_custom_call.1} parent=1 // pred_check_branch
      %136 = sbr.rel (0) target = $region53
    $region52: #{tpu_custom_call.1} parent=1 // pred_region
      %138 = vsyncadd [#allocation15], 0
      %s139 = sshll.u32 %s12, 4
      %s140 = int_to_ptr.hbm [resolvable:$true] %s139
      %s141 = sshll.u32 [#allocation14], 4
      %s142 = int_to_ptr.vmem [resolvable:$true] %s141
      %147 = dma.hbm_to_vmem [thread:$0]  %s140, 256, %s142, [#allocation15], 64, 64, 4
    $region53: #{tpu_custom_call.1} parent=1 // pred_fallthru
      _
    // Predicated region
    $region54: #{tpu_custom_call.1} parent=1 // pred_check
      _
    $region55: #{tpu_custom_call.1} parent=1 // pred_check_branch
      %149 = sbr.rel (0) target = $region57
    $region56: #{tpu_custom_call.1} parent=1 // pred_region
      %151 = vsyncadd [#allocation15], 0
      %s153 = sshll.u32 %s13, 4
      %s154 = int_to_ptr.hbm [resolvable:$true] %s153
      %s155 = sshll.u32 [#allocation16], 4
      %s156 = int_to_ptr.vmem [resolvable:$true] %s155
      %158 = dma.hbm_to_vmem [thread:$0]  %s154, 16, %s156, [#allocation15]
    $region57: #{tpu_custom_call.1} parent=1 // pred_fallthru
      _
    // Predicated region
    $region58: #{tpu_custom_call.1} parent=1 // pred_check
      _
    $region59: #{tpu_custom_call.1} parent=1 // pred_check_branch
      %160 = sbr.rel (0) target = $region61
    $region60: #{tpu_custom_call.1} parent=1 // pred_region
      %162 = vsyncadd [#allocation18], 0
      %s163 = sshll.u32 %s14, 4
      %s164 = int_to_ptr.hbm [resolvable:$true] %s163
      %s165 = sshll.u32 [#allocation17], 4
      %s166 = int_to_ptr.vmem [resolvable:$true] %s165
      %171 = dma.hbm_to_vmem [thread:$0]  %s164, 256, %s166, [#allocation18], 64, 64, 4
    $region61: #{tpu_custom_call.1} parent=1 // pred_fallthru
      _
    // Predicated region
    $region62: #{tpu_custom_call.1} parent=1 // pred_check
      _
    $region63: #{tpu_custom_call.1} parent=1 // pred_check_branch
      %173 = sbr.rel (0) target = $region65
    $region64: #{tpu_custom_call.1} parent=1 // pred_region
      %175 = vsyncadd [#allocation18], 0
      %s177 = sshll.u32 %s15, 4
      %s178 = int_to_ptr.hbm [resolvable:$true] %s177
      %s179 = sshll.u32 [#allocation19], 4
      %s180 = int_to_ptr.vmem [resolvable:$true] %s179
      %182 = dma.hbm_to_vmem [thread:$0]  %s178, 16, %s180, [#allocation18]
    $region65: #{tpu_custom_call.1} parent=1 // pred_fallthru
      _
    // Predicated region
    $region66: #{tpu_custom_call.1} parent=1 // pred_check
      _
    $region67: #{tpu_custom_call.1} parent=1 // pred_check_branch
      %184 = sbr.rel (0) target = $region69
    $region68: #{tpu_custom_call.1} parent=1 // pred_region
      %186 = vsyncadd [#allocation21], 0
      %s188 = sshll.u32 %s16, 4
      %s189 = int_to_ptr.hbm [resolvable:$true] %s188
      %s190 = sshll.u32 [#allocation20], 4
      %s191 = int_to_ptr.vmem [resolvable:$true] %s190
      %193 = dma.hbm_to_vmem [thread:$0]  %s189, 16, %s191, [#allocation21]
    $region69: #{tpu_custom_call.1} parent=1 // pred_fallthru
      _
    // Predicated region
    $region70: #{tpu_custom_call.1} parent=1 // pred_check
      _
    $region71: #{tpu_custom_call.1} parent=1 // pred_check_branch
      %195 = sbr.rel (0) target = $region73
    $region72: #{tpu_custom_call.1} parent=1 // pred_region
      %197 = vsyncadd [#allocation21], 0
      %s199 = sshll.u32 %s17, 4
      %s200 = int_to_ptr.hbm [resolvable:$true] %s199
      %s201 = sshll.u32 [#allocation22], 4
      %s202 = int_to_ptr.vmem [resolvable:$true] %s201
      %204 = dma.hbm_to_vmem [thread:$0]  %s200, 16, %s202, [#allocation21]
    $region73: #{tpu_custom_call.1} parent=1 // pred_fallthru
      _
    // Predicated region
    $region74: #{tpu_custom_call.1} parent=1 // pred_check
      _
    $region75: #{tpu_custom_call.1} parent=1 // pred_check_branch
      %206 = sbr.rel (0) target = $region77
    $region76: #{tpu_custom_call.1} parent=1 // pred_region
      %208 = vsyncadd [#allocation24], 0
      %s209 = sshll.u32 %s18, 4
      %s210 = int_to_ptr.hbm [resolvable:$true] %s209
      %s211 = sshll.u32 [#allocation23], 4
      %s212 = int_to_ptr.vmem [resolvable:$true] %s211
      %217 = dma.hbm_to_vmem [thread:$0]  %s210, 256, %s212, [#allocation24], 64, 64, 4
    $region77: #{tpu_custom_call.1} parent=1 // pred_fallthru
      _
    // Predicated region
    $region78: #{tpu_custom_call.1} parent=1 // pred_check
      _
    $region79: #{tpu_custom_call.1} parent=1 // pred_check_branch
      %219 = sbr.rel (0) target = $region81
    $region80: #{tpu_custom_call.1} parent=1 // pred_region
      %221 = vsyncadd [#allocation24], 0
      %s223 = sshll.u32 %s19, 4
      %s224 = int_to_ptr.hbm [resolvable:$true] %s223
      %s225 = sshll.u32 [#allocation25], 4
      %s226 = int_to_ptr.vmem [resolvable:$true] %s225
      %228 = dma.hbm_to_vmem [thread:$0]  %s224, 16, %s226, [#allocation24]
    $region81: #{tpu_custom_call.1} parent=1 // pred_fallthru
      _
    // Predicated region
    $region82: #{tpu_custom_call.1} parent=1 // pred_check
      _
    $region83: #{tpu_custom_call.1} parent=1 // pred_check_branch
      %230 = sbr.rel (0) target = $region85
    $region84: #{tpu_custom_call.1} parent=1 // pred_region
      _
    $region85: #{tpu_custom_call.1} parent=1 // pred_fallthru
      _
    // Predicated region
    $region86: #{tpu_custom_call.1} parent=1 // pred_check
      _
    $region87: #{tpu_custom_call.1} parent=1 // pred_check_branch
      %232 = sbr.rel (0) target = $region89
    $region88: #{tpu_custom_call.1} parent=1 // pred_region
      _
    $region89: #{tpu_custom_call.1} parent=1 // pred_fallthru
      _
    // Predicated region
    $region90: #{tpu_custom_call.1} parent=1 // pred_check
      _
    $region91: #{tpu_custom_call.1} parent=1 // pred_check_branch
      %234 = sbr.rel (0) target = $region93
    $region92: #{tpu_custom_call.1} parent=1 // pred_region
      _
    $region93: #{tpu_custom_call.1} parent=1 // pred_fallthru
      _
    // Predicated region
    $region94: #{tpu_custom_call.1} parent=1 // pred_check
      _
    $region95: #{tpu_custom_call.1} parent=1 // pred_check_branch
      %236 = sbr.rel (0) target = $region97
    $region96: #{tpu_custom_call.1} parent=1 // pred_region
      _
    $region97: #{tpu_custom_call.1} parent=1 // pred_fallthru
      _
    // Predicated region
    $region98: #{tpu_custom_call.1} parent=1 // pred_check
      _
    $region99: #{tpu_custom_call.1} parent=1 // pred_check_branch
      %238 = sbr.rel (0) target = $region101
    $region100: #{tpu_custom_call.1} parent=1 // pred_region
      %240 = dma.done [#allocation3], 256
    $region101: #{tpu_custom_call.1} parent=1 // pred_fallthru
      _
    // Predicated region
    $region102: #{tpu_custom_call.1} parent=1 // pred_check
      _
    $region103: #{tpu_custom_call.1} parent=1 // pred_check_branch
      %242 = sbr.rel (0) target = $region105
    $region104: #{tpu_custom_call.1} parent=1 // pred_region
      %244 = dma.done [#allocation6], 256
    $region105: #{tpu_custom_call.1} parent=1 // pred_fallthru
      _
    // Predicated region
    $region106: #{tpu_custom_call.1} parent=1 // pred_check
      _
    $region107: #{tpu_custom_call.1} parent=1 // pred_check_branch
      %246 = sbr.rel (0) target = $region109
    $region108: #{tpu_custom_call.1} parent=1 // pred_region
      %248 = dma.done [#allocation6], 256
    $region109: #{tpu_custom_call.1} parent=1 // pred_fallthru
      _
    // Predicated region
    $region110: #{tpu_custom_call.1} parent=1 // pred_check
      _
    $region111: #{tpu_custom_call.1} parent=1 // pred_check_branch
      %250 = sbr.rel (0) target = $region113
    $region112: #{tpu_custom_call.1} parent=1 // pred_region
      %252 = dma.done [#allocation9], 256
    $region113: #{tpu_custom_call.1} parent=1 // pred_fallthru
      _
    // Predicated region
    $region114: #{tpu_custom_call.1} parent=1 // pred_check
      _
    $region115: #{tpu_custom_call.1} parent=1 // pred_check_branch
      %254 = sbr.rel (0) target = $region117
    $region116: #{tpu_custom_call.1} parent=1 // pred_region
      %256 = dma.done [#allocation9], 16
    $region117: #{tpu_custom_call.1} parent=1 // pred_fallthru
      _
    // Predicated region
    $region118: #{tpu_custom_call.1} parent=1 // pred_check
      _
    $region119: #{tpu_custom_call.1} parent=1 // pred_check_branch
      %258 = sbr.rel (0) target = $region121
    $region120: #{tpu_custom_call.1} parent=1 // pred_region
      %260 = dma.done [#allocation12], 256
    $region121: #{tpu_custom_call.1} parent=1 // pred_fallthru
      _
    // Predicated region
    $region122: #{tpu_custom_call.1} parent=1 // pred_check
      _
    $region123: #{tpu_custom_call.1} parent=1 // pred_check_branch
      %262 = sbr.rel (0) target = $region125
    $region124: #{tpu_custom_call.1} parent=1 // pred_region
      %264 = dma.done [#allocation12], 16
    $region125: #{tpu_custom_call.1} parent=1 // pred_fallthru
      _
    // Predicated region
    $region126: #{tpu_custom_call.1} parent=1 // pred_check
      _
    $region127: #{tpu_custom_call.1} parent=1 // pred_check_branch
      %266 = sbr.rel (0) target = $region129
    $region128: #{tpu_custom_call.1} parent=1 // pred_region
      %268 = dma.done [#allocation15], 256
    $region129: #{tpu_custom_call.1} parent=1 // pred_fallthru
      _
    // Predicated region
    $region130: #{tpu_custom_call.1} parent=1 // pred_check
      _
    $region131: #{tpu_custom_call.1} parent=1 // pred_check_branch
      %270 = sbr.rel (0) target = $region133
    $region132: #{tpu_custom_call.1} parent=1 // pred_region
      %272 = dma.done [#allocation15], 16
    $region133: #{tpu_custom_call.1} parent=1 // pred_fallthru
      _
    // Predicated region
    $region134: #{tpu_custom_call.1} parent=1 // pred_check
      _
    $region135: #{tpu_custom_call.1} parent=1 // pred_check_branch
      %274 = sbr.rel (0) target = $region137
    $region136: #{tpu_custom_call.1} parent=1 // pred_region
      %276 = dma.done [#allocation18], 256
    $region137: #{tpu_custom_call.1} parent=1 // pred_fallthru
      _
    // Predicated region
    $region138: #{tpu_custom_call.1} parent=1 // pred_check
      _
    $region139: #{tpu_custom_call.1} parent=1 // pred_check_branch
      %278 = sbr.rel (0) target = $region141
    $region140: #{tpu_custom_call.1} parent=1 // pred_region
      %280 = dma.done [#allocation18], 16
    $region141: #{tpu_custom_call.1} parent=1 // pred_fallthru
      _
    // Predicated region
    $region142: #{tpu_custom_call.1} parent=1 // pred_check
      _
    $region143: #{tpu_custom_call.1} parent=1 // pred_check_branch
      %282 = sbr.rel (0) target = $region145
    $region144: #{tpu_custom_call.1} parent=1 // pred_region
      %284 = dma.done [#allocation21], 16
    $region145: #{tpu_custom_call.1} parent=1 // pred_fallthru
      _
    // Predicated region
    $region146: #{tpu_custom_call.1} parent=1 // pred_check
      _
    $region147: #{tpu_custom_call.1} parent=1 // pred_check_branch
      %286 = sbr.rel (0) target = $region149
    $region148: #{tpu_custom_call.1} parent=1 // pred_region
      %288 = dma.done [#allocation21], 16
    $region149: #{tpu_custom_call.1} parent=1 // pred_fallthru
      _
    // Predicated region
    $region150: #{tpu_custom_call.1} parent=1 // pred_check
      _
    $region151: #{tpu_custom_call.1} parent=1 // pred_check_branch
      %290 = sbr.rel (0) target = $region153
    $region152: #{tpu_custom_call.1} parent=1 // pred_region
      %292 = dma.done [#allocation24], 256
    $region153: #{tpu_custom_call.1} parent=1 // pred_fallthru
      _
    // Predicated region
    $region154: #{tpu_custom_call.1} parent=1 // pred_check
      _
    $region155: #{tpu_custom_call.1} parent=1 // pred_check_branch
      %294 = sbr.rel (0) target = $region157
    $region156: #{tpu_custom_call.1} parent=1 // pred_region
      %296 = dma.done [#allocation24], 16
    $region157: #{tpu_custom_call.1} parent=1 // pred_fallthru
      _
    %v298 = vld [vmem:[%s0] sm:$0xff]
    %v299 = vld [vmem:[%s0 + $0x8] sm:$0xff]
    %v300 = vld [vmem:[%s1] sm:$0xff]
    %v301 = vld [vmem:[%s1 + $0x8] sm:$0xff]
    %v302 = vld [vmem:[%s1 + $0x10] sm:$0xff]
    %v303 = vld [vmem:[%s1 + $0x18] sm:$0xff]
    %v304 = vpack.c.bf16 %v299, %v298
    %v305 = vld [vmem:[#allocation7] sm:$0xf]
    %v306 = vld [vmem:[#allocation7 + $0x4] sm:$0xf]
    %v307 = vld [vmem:[#allocation7 + $0x8] sm:$0xf]
    %v308 = vld [vmem:[#allocation7 + $0xc] sm:$0xf]
    %v309 = vld [vmem:[%s5] sm:$0x1]
    %v311 = vperm.slane %v309, 0
    %v317 = vunpack.c.l.b16 %v305
    %v318 = vunpack.c.l.b16 %v306
    %v319 = vunpack.c.l.b16 %v307
    %v320 = vunpack.c.l.b16 %v308
    %v321 = vpack.c.b16 %v318, %v317
    %v322 = vpack.c.b16 %v320, %v319
    %vm325 = vcmask 261120
    %v327 = vsel %vm325, %v304, 0
    %329 = vmatpush.bf16.msra.mxu0 0
    %330 = vmatpush.bf16.msra.mxu0 0
    %331 = vmatpush.bf16.msra.mxu0 0
    %332 = vmatpush.bf16.msra.mxu0 0
    %333 = vmatpush.bf16.msra.mxu0 0
    %334 = vmatpush.bf16.msra.mxu0 0
    %335 = vmatpush.bf16.msra.mxu0 %v322
    %336 = vmatpush.bf16.msra.mxu0 %v321
    %337 = vmatmul.bf16.gmra.mxu0 %v327
    %v338 = vpop.f32.mrf.mxu0
    %v339 = vadd.f32 %v311, %v338
    %v340 = vpop.f32.mrf.mxu0
    %v341 = vadd.f32 %v311, %v340
    %342 = vdwg.mxu0
    %v343 = vld [vmem:[#allocation2] sm:$0xff]
    %v344 = vld [vmem:[#allocation2 + $0x8] sm:$0xff]
    %v345 = vld [vmem:[#allocation8] sm:$0xf]
    %v346 = vld [vmem:[#allocation8 + $0x4] sm:$0xf]
    %v347 = vld [vmem:[#allocation8 + $0x8] sm:$0xf]
    %v348 = vld [vmem:[#allocation8 + $0xc] sm:$0xf]
    %v349 = vmul.f32 %v339, 0.35355338
    %v350 = vmul.f32 %v341, 0.35355338
    %v351 = vpack.c.bf16 %v349, %v349
    %v352 = vpack.c.bf16 %v350, %v350
    %v353 = vpack.c.bf16 %v339, %v339
    %v354 = vpack.c.bf16 %v341, %v341
    %v357 = vunpack.c.l.b16 %v351
    %v358 = vunpack.c.l.b16 %v352
    %v359 = vpack.c.b16 %v358, %v357
    %v362 = vunpack.c.l.b16 %v353
    %v363 = vunpack.c.l.b16 %v354
    %v364 = vpack.c.b16 %v363, %v362
    %365 = vrot.lane.b32.xlu0 %v364, 96
    %v366 = vpop.permute.xlu0 %365
    %vm367 = vcmask 64512
    %v369 = vsel %vm367, %v359, 0
    %v372 = vsel %vm367, %v366, 0
    %374 = vmatpush.bf16.xpose.msra.mxu0 0
    %375 = vmatpush.bf16.xpose.msra.mxu0 0
    %376 = vmatpush.bf16.xpose.msra.mxu0 0
    %377 = vmatpush.bf16.xpose.msra.mxu0 0
    %378 = vmatpush.bf16.xpose.msra.mxu0 0
    %379 = vmatpush.bf16.xpose.msra.mxu0 0
    %380 = vmatpush.bf16.xpose.msra.mxu0 0
    %381 = vmatpush.bf16.xpose.msra.mxu0 %v372
    %382 = vmatmul.bf16.gmra.mxu0 %v369
    %v383 = vpop.f32.mrf.mxu0
    %v384 = vadd.f32 %v343, %v383
    %v385 = vpop.f32.mrf.mxu0
    %v386 = vadd.f32 %v344, %v385
    %387 = vdwg.mxu0
    %vm388 = vcmask 130048
    %v389 = vsel %vm388, %v384, -inf
    %390 = vmax.xlane.f32.xlu0 %v389
    %v391 = vpop.xlane.xlu0 %390
    %v392 = vsel %vm388, %v386, -inf
    %393 = vmax.xlane.f32.xlu0 %v392
    %v394 = vpop.xlane.xlu0 %393
    %v395 = vsub.f32 %v384, %v391
    %v396 = vsub.f32 %v386, %v394
    %v397 = vmul.f32 %v395, 1.442695
    %v398 = vpow.pop %v397
    %v399 = vmul.f32 %v396, 1.442695
    %v400 = vpow.pop %v399
    %v401 = vsel %vm388, %v398, 0.0
    %402 = vadd.xlane.f32.xlu0 %v401
    %v403 = vpop.xlane.xlu0 %402
    %v404 = vsel %vm388, %v400, 0.0
    %405 = vadd.xlane.f32.xlu0 %v404
    %v406 = vpop.xlane.xlu0 %405
    %v407 = vrcp.pop %v403
    %v408 = vrcp.pop %v406
    %v409 = vmul.f32 %v398, %v407
    %v410 = vmul.f32 %v400, %v408
    %v411 = vpack.c.bf16 %v410, %v409
    %412 = vrot.lane.b32.xlu0 %v364, 64
    %v413 = vpop.permute.xlu0 %412
    %v416 = vsel %vm388, %v411, 0
    %418 = vmatpush.bf16.msra.mxu0 0
    %419 = vmatpush.bf16.msra.mxu0 0
    %420 = vmatpush.bf16.msra.mxu0 0
    %421 = vmatpush.bf16.msra.mxu0 0
    %422 = vmatpush.bf16.msra.mxu0 0
    %423 = vmatpush.bf16.msra.mxu0 0
    %424 = vmatpush.bf16.msra.mxu0 0
    %425 = vmatpush.bf16.msra.mxu0 %v413
    %426 = vmatmul.bf16.gmra.mxu0 %v416
    %v427 = vpop.f32.mrf.mxu0
    %v428 = vadd.f32 0.0, %v427
    %v429 = vpop.f32.mrf.mxu0
    %v430 = vadd.f32 0.0, %v429
    %431 = vdwg.mxu0
    %v432 = vpack.c.bf16 %v430, %v428
    %433 = vrot.lane.b32.xlu0 %v359, 120
    %v434 = vpop.permute.xlu0 %433
    %435 = vrot.lane.b32.xlu0 %v364, 88
    %v436 = vpop.permute.xlu0 %435
    %v438 = vsel %vm367, %v434, 0
    %v441 = vsel %vm367, %v436, 0
    %443 = vmatpush.bf16.xpose.msra.mxu0 0
    %444 = vmatpush.bf16.xpose.msra.mxu0 0
    %445 = vmatpush.bf16.xpose.msra.mxu0 0
    %446 = vmatpush.bf16.xpose.msra.mxu0 0
    %447 = vmatpush.bf16.xpose.msra.mxu0 0
    %448 = vmatpush.bf16.xpose.msra.mxu0 0
    %449 = vmatpush.bf16.xpose.msra.mxu0 0
    %450 = vmatpush.bf16.xpose.msra.mxu0 %v441
    %451 = vmatmul.bf16.gmra.mxu0 %v438
    %v452 = vpop.f32.mrf.mxu0
    %v453 = vadd.f32 %v343, %v452
    %v454 = vpop.f32.mrf.mxu0
    %v455 = vadd.f32 %v344, %v454
    %456 = vdwg.mxu0
    %v457 = vsel %vm388, %v453, -inf
    %458 = vmax.xlane.f32.xlu0 %v457
    %v459 = vpop.xlane.xlu0 %458
    %v460 = vsel %vm388, %v455, -inf
    %461 = vmax.xlane.f32.xlu0 %v460
    %v462 = vpop.xlane.xlu0 %461
    %v463 = vsub.f32 %v453, %v459
    %v464 = vsub.f32 %v455, %v462
    %v465 = vmul.f32 %v463, 1.442695
    %v466 = vpow.pop %v465
    %v467 = vmul.f32 %v464, 1.442695
    %v468 = vpow.pop %v467
    %v469 = vsel %vm388, %v466, 0.0
    %470 = vadd.xlane.f32.xlu0 %v469
    %v471 = vpop.xlane.xlu0 %470
    %v472 = vsel %vm388, %v468, 0.0
    %473 = vadd.xlane.f32.xlu0 %v472
    %v474 = vpop.xlane.xlu0 %473
    %v475 = vrcp.pop %v471
    %v476 = vrcp.pop %v474
    %v477 = vmul.f32 %v466, %v475
    %v478 = vmul.f32 %v468, %v476
    %v479 = vpack.c.bf16 %v478, %v477
    %480 = vrot.lane.b32.xlu0 %v364, 56
    %v481 = vpop.permute.xlu0 %480
    %v484 = vsel %vm388, %v479, 0
    %486 = vmatpush.bf16.msra.mxu0 0
    %487 = vmatpush.bf16.msra.mxu0 0
    %488 = vmatpush.bf16.msra.mxu0 0
    %489 = vmatpush.bf16.msra.mxu0 0
    %490 = vmatpush.bf16.msra.mxu0 0
    %491 = vmatpush.bf16.msra.mxu0 0
    %492 = vmatpush.bf16.msra.mxu0 0
    %493 = vmatpush.bf16.msra.mxu0 %v481
    %494 = vmatmul.bf16.gmra.mxu0 %v484
    %v495 = vpop.f32.mrf.mxu0
    %v496 = vadd.f32 0.0, %v495
    %v497 = vpop.f32.mrf.mxu0
    %v498 = vadd.f32 0.0, %v497
    %499 = vdwg.mxu0
    %v500 = vpack.c.bf16 %v498, %v496
    %v502 = vsel %vm367, %v500, 0
    %vm504 = vcmask 1043456
    %v506 = vsel %vm504, %v346, 0
    %508 = vmatpush.bf16.msra.mxu0 0
    %509 = vmatpush.bf16.msra.mxu0 0
    %510 = vmatpush.bf16.msra.mxu0 0
    %511 = vmatpush.bf16.msra.mxu0 0
    %512 = vmatpush.bf16.msra.mxu0 0
    %513 = vmatpush.bf16.msra.mxu0 0
    %514 = vmatpush.bf16.msra.mxu0 0
    %515 = vmatpush.bf16.msra.mxu0 %v506
    %516 = vmatmul.bf16.gmra.mxu0 %v502
    %v517 = vpop.f32.mrf.mxu0
    %v518 = vadd.f32 0.0, %v517
    %v519 = vpop.f32.mrf.mxu0
    %v520 = vadd.f32 0.0, %v519
    %521 = vdwg.mxu0
    %v523 = vsel %vm367, %v432, 0
    %v526 = vsel %vm504, %v345, 0
    %528 = vmatpush.bf16.msra.mxu0 0
    %529 = vmatpush.bf16.msra.mxu0 0
    %530 = vmatpush.bf16.msra.mxu0 0
    %531 = vmatpush.bf16.msra.mxu0 0
    %532 = vmatpush.bf16.msra.mxu0 0
    %533 = vmatpush.bf16.msra.mxu0 0
    %534 = vmatpush.bf16.msra.mxu0 0
    %535 = vmatpush.bf16.msra.mxu0 %v526
    %536 = vmatmul.bf16.gmra.mxu0 %v523
    %v537 = vpop.f32.mrf.mxu0
    %v538 = vadd.f32 %v518, %v537
    %v539 = vpop.f32.mrf.mxu0
    %v540 = vadd.f32 %v520, %v539
    %541 = vdwg.mxu0
    %542 = vrot.lane.b32.xlu0 %v359, 112
    %v543 = vpop.permute.xlu0 %542
    %544 = vrot.lane.b32.xlu0 %v364, 80
    %v545 = vpop.permute.xlu0 %544
    %v547 = vsel %vm367, %v543, 0
    %v550 = vsel %vm367, %v545, 0
    %552 = vmatpush.bf16.xpose.msra.mxu0 0
    %553 = vmatpush.bf16.xpose.msra.mxu0 0
    %554 = vmatpush.bf16.xpose.msra.mxu0 0
    %555 = vmatpush.bf16.xpose.msra.mxu0 0
    %556 = vmatpush.bf16.xpose.msra.mxu0 0
    %557 = vmatpush.bf16.xpose.msra.mxu0 0
    %558 = vmatpush.bf16.xpose.msra.mxu0 0
    %559 = vmatpush.bf16.xpose.msra.mxu0 %v550
    %560 = vmatmul.bf16.gmra.mxu0 %v547
    %v561 = vpop.f32.mrf.mxu0
    %v562 = vadd.f32 %v343, %v561
    %v563 = vpop.f32.mrf.mxu0
    %v564 = vadd.f32 %v344, %v563
    %565 = vdwg.mxu0
    %v566 = vsel %vm388, %v562, -inf
    %567 = vmax.xlane.f32.xlu0 %v566
    %v568 = vpop.xlane.xlu0 %567
    %v569 = vsel %vm388, %v564, -inf
    %570 = vmax.xlane.f32.xlu0 %v569
    %v571 = vpop.xlane.xlu0 %570
    %v572 = vsub.f32 %v562, %v568
    %v573 = vsub.f32 %v564, %v571
    %v574 = vmul.f32 %v572, 1.442695
    %v575 = vpow.pop %v574
    %v576 = vmul.f32 %v573, 1.442695
    %v577 = vpow.pop %v576
    %v578 = vsel %vm388, %v575, 0.0
    %579 = vadd.xlane.f32.xlu0 %v578
    %v580 = vpop.xlane.xlu0 %579
    %v581 = vsel %vm388, %v577, 0.0
    %582 = vadd.xlane.f32.xlu0 %v581
    %v583 = vpop.xlane.xlu0 %582
    %v584 = vrcp.pop %v580
    %v585 = vrcp.pop %v583
    %v586 = vmul.f32 %v575, %v584
    %v587 = vmul.f32 %v577, %v585
    %v588 = vpack.c.bf16 %v587, %v586
    %589 = vrot.lane.b32.xlu0 %v364, 48
    %v590 = vpop.permute.xlu0 %589
    %v593 = vsel %vm388, %v588, 0
    %595 = vmatpush.bf16.msra.mxu0 0
    %596 = vmatpush.bf16.msra.mxu0 0
    %597 = vmatpush.bf16.msra.mxu0 0
    %598 = vmatpush.bf16.msra.mxu0 0
    %599 = vmatpush.bf16.msra.mxu0 0
    %600 = vmatpush.bf16.msra.mxu0 0
    %601 = vmatpush.bf16.msra.mxu0 0
    %602 = vmatpush.bf16.msra.mxu0 %v590
    %603 = vmatmul.bf16.gmra.mxu0 %v593
    %v604 = vpop.f32.mrf.mxu0
    %v605 = vadd.f32 0.0, %v604
    %v606 = vpop.f32.mrf.mxu0
    %v607 = vadd.f32 0.0, %v606
    %608 = vdwg.mxu0
    %v609 = vpack.c.bf16 %v607, %v605
    %v611 = vsel %vm367, %v609, 0
    %v614 = vsel %vm504, %v347, 0
    %616 = vmatpush.bf16.msra.mxu0 0
    %617 = vmatpush.bf16.msra.mxu0 0
    %618 = vmatpush.bf16.msra.mxu0 0
    %619 = vmatpush.bf16.msra.mxu0 0
    %620 = vmatpush.bf16.msra.mxu0 0
    %621 = vmatpush.bf16.msra.mxu0 0
    %622 = vmatpush.bf16.msra.mxu0 0
    %623 = vmatpush.bf16.msra.mxu0 %v614
    %624 = vmatmul.bf16.gmra.mxu0 %v611
    %v625 = vpop.f32.mrf.mxu0
    %v626 = vadd.f32 0.0, %v625
    %v627 = vpop.f32.mrf.mxu0
    %v628 = vadd.f32 0.0, %v627
    %629 = vdwg.mxu0
    %v630 = vadd.f32 %v538, %v626
    %v631 = vadd.f32 %v540, %v628
    %632 = vrot.lane.b32.xlu0 %v359, 104
    %v633 = vpop.permute.xlu0 %632
    %634 = vrot.lane.b32.xlu0 %v364, 72
    %v635 = vpop.permute.xlu0 %634
    %v637 = vsel %vm367, %v633, 0
    %v640 = vsel %vm367, %v635, 0
    %642 = vmatpush.bf16.xpose.msra.mxu0 0
    %643 = vmatpush.bf16.xpose.msra.mxu0 0
    %644 = vmatpush.bf16.xpose.msra.mxu0 0
    %645 = vmatpush.bf16.xpose.msra.mxu0 0
    %646 = vmatpush.bf16.xpose.msra.mxu0 0
    %647 = vmatpush.bf16.xpose.msra.mxu0 0
    %648 = vmatpush.bf16.xpose.msra.mxu0 0
    %649 = vmatpush.bf16.xpose.msra.mxu0 %v640
    %650 = vmatmul.bf16.gmra.mxu0 %v637
    %v651 = vpop.f32.mrf.mxu0
    %v652 = vadd.f32 %v343, %v651
    %v653 = vpop.f32.mrf.mxu0
    %v654 = vadd.f32 %v344, %v653
    %655 = vdwg.mxu0
    %v656 = vsel %vm388, %v652, -inf
    %657 = vmax.xlane.f32.xlu0 %v656
    %v658 = vpop.xlane.xlu0 %657
    %v659 = vsel %vm388, %v654, -inf
    %660 = vmax.xlane.f32.xlu0 %v659
    %v661 = vpop.xlane.xlu0 %660
    %v662 = vsub.f32 %v652, %v658
    %v663 = vsub.f32 %v654, %v661
    %v664 = vmul.f32 %v662, 1.442695
    %v665 = vpow.pop %v664
    %v666 = vmul.f32 %v663, 1.442695
    %v667 = vpow.pop %v666
    %v668 = vsel %vm388, %v665, 0.0
    %669 = vadd.xlane.f32.xlu0 %v668
    %v670 = vpop.xlane.xlu0 %669
    %v671 = vsel %vm388, %v667, 0.0
    %672 = vadd.xlane.f32.xlu0 %v671
    %v673 = vpop.xlane.xlu0 %672
    %v674 = vrcp.pop %v670
    %v675 = vrcp.pop %v673
    %v676 = vmul.f32 %v665, %v674
    %v677 = vmul.f32 %v667, %v675
    %v678 = vpack.c.bf16 %v677, %v676
    %679 = vrot.lane.b32.xlu0 %v364, 40
    %v680 = vpop.permute.xlu0 %679
    %v683 = vsel %vm388, %v678, 0
    %685 = vmatpush.bf16.msra.mxu0 0
    %686 = vmatpush.bf16.msra.mxu0 0
    %687 = vmatpush.bf16.msra.mxu0 0
    %688 = vmatpush.bf16.msra.mxu0 0
    %689 = vmatpush.bf16.msra.mxu0 0
    %690 = vmatpush.bf16.msra.mxu0 0
    %691 = vmatpush.bf16.msra.mxu0 0
    %692 = vmatpush.bf16.msra.mxu0 %v680
    %693 = vmatmul.bf16.gmra.mxu0 %v683
    %v694 = vpop.f32.mrf.mxu0
    %v695 = vadd.f32 0.0, %v694
    %v696 = vpop.f32.mrf.mxu0
    %v697 = vadd.f32 0.0, %v696
    %698 = vdwg.mxu0
    %v699 = vpack.c.bf16 %v697, %v695
    %v701 = vsel %vm367, %v699, 0
    %v704 = vsel %vm504, %v348, 0
    %706 = vmatpush.bf16.msra.mxu0 0
    %707 = vmatpush.bf16.msra.mxu0 0
    %708 = vmatpush.bf16.msra.mxu0 0
    %709 = vmatpush.bf16.msra.mxu0 0
    %710 = vmatpush.bf16.msra.mxu0 0
    %711 = vmatpush.bf16.msra.mxu0 0
    %712 = vmatpush.bf16.msra.mxu0 0
    %713 = vmatpush.bf16.msra.mxu0 %v704
    %714 = vmatmul.bf16.gmra.mxu0 %v701
    %v715 = vpop.f32.mrf.mxu0
    %v716 = vadd.f32 0.0, %v715
    %v717 = vpop.f32.mrf.mxu0
    %v718 = vadd.f32 0.0, %v717
    %719 = vdwg.mxu0
    %v720 = vadd.f32 %v630, %v716
    %v721 = vadd.f32 %v631, %v718
    %v722 = vld [vmem:[%s7] sm:$0x1]
    %v724 = vperm.slane %v722, 0
    %v726 = vadd.f32 %v720, %v724
    %v727 = vadd.f32 %v721, %v724
    %v728 = vadd.f32 %v726, %v298
    %v729 = vadd.f32 %v727, %v299
    %v730 = vld [vmem:[%s8] sm:$0x1]
    %v731 = vld [vmem:[#allocation10] sm:$0x1]
    %v732 = vsel %vm325, %v728, 0.0
    %733 = vadd.xlane.f32.xlu0 %v732
    %v734 = vpop.xlane.xlu0 %733
    %v735 = vsel %vm325, %v729, 0.0
    %736 = vadd.xlane.f32.xlu0 %v735
    %v737 = vpop.xlane.xlu0 %736
    %v738 = vrcp.pop 32.0
    %v739 = vmul.f32 32.0, %v738
    %v740 = vsub.f32 1.0, %v739
    %v741 = vmul.f32 %v738, %v740
    %v742 = vadd.f32 %v738, %v741
    %vm743 = vweird.f32 %v738
    %v744 = vsel %vm743, %v738, %v742
    %v745 = vmul.f32 %v734, %v744
    %v746 = vmul.f32 %v737, %v744
    %v747 = vsub.f32 %v728, %v745
    %v748 = vsub.f32 %v729, %v746
    %v749 = vmul.f32 %v747, %v747
    %v750 = vmul.f32 %v748, %v748
    %v751 = vsel %vm325, %v749, 0.0
    %752 = vadd.xlane.f32.xlu0 %v751
    %v753 = vpop.xlane.xlu0 %752
    %v754 = vsel %vm325, %v750, 0.0
    %755 = vadd.xlane.f32.xlu0 %v754
    %v756 = vpop.xlane.xlu0 %755
    %v757 = vmul.f32 %v753, %v744
    %v758 = vmul.f32 %v756, %v744
    %v759 = vadd.f32 %v757, 1e-12
    %v760 = vadd.f32 %v758, 1e-12
    %v761 = vrsqrt.pop %v759
    %v762 = vmul.f32 %v761, %v759
    %v763 = vmul.f32 %v762, %v761
    %v764 = vmul.f32 0.5, %v763
    %v765 = vsub.f32 1.5, %v764
    %v766 = vmul.f32 %v761, %v765
    %vm767 = vweird.f32 %v759
    %vm768 = vweird.f32 %v761
    %vm769 = vmor %vm767, %vm768
    %v770 = vsel %vm769, %v761, %v766
    %v771 = vrsqrt.pop %v760
    %v772 = vmul.f32 %v771, %v760
    %v773 = vmul.f32 %v772, %v771
    %v774 = vmul.f32 0.5, %v773
    %v775 = vsub.f32 1.5, %v774
    %v776 = vmul.f32 %v771, %v775
    %vm777 = vweird.f32 %v760
    %vm778 = vweird.f32 %v771
    %vm779 = vmor %vm777, %vm778
    %v780 = vsel %vm779, %v771, %v776
    %v781 = vmul.f32 %v747, %v770
    %v782 = vmul.f32 %v748, %v780
    %v784 = vperm.slane %v730, 0
    %v786 = vmul.f32 %v781, %v784
    %v787 = vmul.f32 %v782, %v784
    %v789 = vperm.slane %v731, 0
    %v791 = vadd.f32 %v786, %v789
    %v792 = vadd.f32 %v787, %v789
    %v793 = vpack.c.bf16 %v792, %v791
    %v794 = vld [vmem:[#allocation11] sm:$0xf]
    %v795 = vld [vmem:[#allocation11 + $0x4] sm:$0xf]
    %v796 = vld [vmem:[#allocation11 + $0x8] sm:$0xf]
    %v797 = vld [vmem:[#allocation11 + $0xc] sm:$0xf]
    %v798 = vld [vmem:[#allocation13] sm:$0x1]
    %v800 = vperm.slane %v798, 0
    %v806 = vunpack.c.l.b16 %v794
    %v807 = vunpack.c.l.b16 %v795
    %v808 = vunpack.c.l.b16 %v796
    %v809 = vunpack.c.l.b16 %v797
    %v810 = vpack.c.b16 %v807, %v806
    %v811 = vpack.c.b16 %v809, %v808
    %v815 = vsel %vm325, %v793, 0
    %817 = vmatpush.bf16.msra.mxu0 0
    %818 = vmatpush.bf16.msra.mxu0 0
    %819 = vmatpush.bf16.msra.mxu0 0
    %820 = vmatpush.bf16.msra.mxu0 0
    %821 = vmatpush.bf16.msra.mxu0 0
    %822 = vmatpush.bf16.msra.mxu0 0
    %823 = vmatpush.bf16.msra.mxu0 %v811
    %824 = vmatpush.bf16.msra.mxu0 %v810
    %825 = vmatmul.bf16.gmra.mxu0 %v815
    %v826 = vpop.f32.mrf.mxu0
    %v827 = vadd.f32 %v800, %v826
    %v828 = vpop.f32.mrf.mxu0
    %v829 = vadd.f32 %v800, %v828
    %830 = vdwg.mxu0
    %v831 = vpack.c.bf16 %v301, %v300
    %v832 = vpack.c.bf16 %v303, %v302
    %v833 = vld [vmem:[#allocation14] sm:$0xf]
    %v834 = vld [vmem:[#allocation14 + $0x4] sm:$0xf]
    %v835 = vld [vmem:[#allocation14 + $0x8] sm:$0xf]
    %v836 = vld [vmem:[#allocation14 + $0xc] sm:$0xf]
    %v837 = vld [vmem:[#allocation16] sm:$0x1]
    %v839 = vperm.slane %v837, 0
    %v845 = vunpack.c.l.b16 %v833
    %v846 = vunpack.c.l.b16 %v834
    %v847 = vunpack.c.l.b16 %v835
    %v848 = vunpack.c.l.b16 %v836
    %v849 = vpack.c.b16 %v846, %v845
    %v850 = vpack.c.b16 %v848, %v847
    %v854 = vsel %vm325, %v831, 0
    %v857 = vsel %vm325, %v832, 0
    %859 = vmatpush.bf16.msra.mxu0 0
    %860 = vmatpush.bf16.msra.mxu0 0
    %861 = vmatpush.bf16.msra.mxu0 0
    %862 = vmatpush.bf16.msra.mxu0 0
    %863 = vmatpush.bf16.msra.mxu0 0
    %864 = vmatpush.bf16.msra.mxu0 0
    %865 = vmatpush.bf16.msra.mxu0 %v850
    %866 = vmatpush.bf16.msra.mxu0 %v849
    %867 = vmatmul.bf16.gmra.mxu0 %v854
    %v868 = vpop.f32.mrf.mxu0
    %v869 = vadd.f32 %v839, %v868
    %v870 = vpop.f32.mrf.mxu0
    %v871 = vadd.f32 %v839, %v870
    %872 = vmatmul.bf16.gmra.mxu0 %v857
    %v873 = vpop.f32.mrf.mxu0
    %v874 = vadd.f32 %v839, %v873
    %v875 = vpop.f32.mrf.mxu0
    %v876 = vadd.f32 %v839, %v875
    %877 = vdwg.mxu0
    %v878 = vld [vmem:[#allocation5] sm:$0xff]
    %v879 = vld [vmem:[#allocation5 + $0x8] sm:$0xff]
    %v880 = vld [vmem:[#allocation17] sm:$0xf]
    %v881 = vld [vmem:[#allocation17 + $0x4] sm:$0xf]
    %v882 = vld [vmem:[#allocation17 + $0x8] sm:$0xf]
    %v883 = vld [vmem:[#allocation17 + $0xc] sm:$0xf]
    %v884 = vmul.f32 %v827, 0.35355338
    %v885 = vmul.f32 %v829, 0.35355338
    %v886 = vpack.c.bf16 %v884, %v884
    %v887 = vpack.c.bf16 %v885, %v885
    %v888 = vpack.c.bf16 %v869, %v869
    %v889 = vpack.c.bf16 %v871, %v871
    %v890 = vpack.c.bf16 %v874, %v874
    %v891 = vpack.c.bf16 %v876, %v876
    %v894 = vunpack.c.l.b16 %v886
    %v895 = vunpack.c.l.b16 %v887
    %v896 = vpack.c.b16 %v895, %v894
    %v901 = vunpack.c.l.b16 %v888
    %v902 = vunpack.c.l.b16 %v889
    %v903 = vunpack.c.l.b16 %v890
    %v904 = vunpack.c.l.b16 %v891
    %v905 = vpack.c.b16 %v902, %v901
    %v906 = vpack.c.b16 %v904, %v903
    %v908 = vsel %vm367, %v896, 0
    %v911 = vsel %vm367, %v905, 0
    %v914 = vsel %vm367, %v906, 0
    %916 = vmatpush.bf16.xpose.msra.mxu0 0
    %917 = vmatpush.bf16.xpose.msra.mxu0 0
    %918 = vmatpush.bf16.xpose.msra.mxu0 0
    %919 = vmatpush.bf16.xpose.msra.mxu0 0
    %920 = vmatpush.bf16.xpose.msra.mxu0 0
    %921 = vmatpush.bf16.xpose.msra.mxu0 0
    %922 = vmatpush.bf16.xpose.msra.mxu0 %v914
    %923 = vmatpush.bf16.xpose.msra.mxu0 %v911
    %924 = vmatmul.bf16.gmra.mxu0 %v908
    %v925 = vpop.f32.mrf.mxu0
    %v926 = vadd.f32 %v878, %v925
    %v927 = vpop.f32.mrf.mxu0
    %v928 = vadd.f32 %v879, %v927
    %929 = vdwg.mxu0
    %v930 = vsel %vm325, %v926, -inf
    %931 = vmax.xlane.f32.xlu0 %v930
    %v932 = vpop.xlane.xlu0 %931
    %v933 = vsel %vm325, %v928, -inf
    %934 = vmax.xlane.f32.xlu0 %v933
    %v935 = vpop.xlane.xlu0 %934
    %v936 = vsub.f32 %v926, %v932
    %v937 = vsub.f32 %v928, %v935
    %v938 = vmul.f32 %v936, 1.442695
    %v939 = vpow.pop %v938
    %v940 = vmul.f32 %v937, 1.442695
    %v941 = vpow.pop %v940
    %v942 = vsel %vm325, %v939, 0.0
    %943 = vadd.xlane.f32.xlu0 %v942
    %v944 = vpop.xlane.xlu0 %943
    %v945 = vsel %vm325, %v941, 0.0
    %946 = vadd.xlane.f32.xlu0 %v945
    %v947 = vpop.xlane.xlu0 %946
    %v948 = vrcp.pop %v944
    %v949 = vrcp.pop %v947
    %v950 = vmul.f32 %v939, %v948
    %v951 = vmul.f32 %v941, %v949
    %v952 = vpack.c.bf16 %v951, %v950
    %953 = vrot.lane.b32.xlu0 %v905, 96
    %v954 = vpop.permute.xlu0 %953
    %955 = vrot.lane.b32.xlu0 %v906, 96
    %v956 = vpop.permute.xlu0 %955
    %v960 = vsel %vm325, %v952, 0
    %962 = vmatpush.bf16.msra.mxu0 0
    %963 = vmatpush.bf16.msra.mxu0 0
    %964 = vmatpush.bf16.msra.mxu0 0
    %965 = vmatpush.bf16.msra.mxu0 0
    %966 = vmatpush.bf16.msra.mxu0 0
    %967 = vmatpush.bf16.msra.mxu0 0
    %968 = vmatpush.bf16.msra.mxu0 %v956
    %969 = vmatpush.bf16.msra.mxu0 %v954
    %970 = vmatmul.bf16.gmra.mxu0 %v960
    %v971 = vpop.f32.mrf.mxu0
    %v972 = vadd.f32 0.0, %v971
    %v973 = vpop.f32.mrf.mxu0
    %v974 = vadd.f32 0.0, %v973
    %975 = vdwg.mxu0
    %v976 = vpack.c.bf16 %v974, %v972
    %977 = vrot.lane.b32.xlu0 %v896, 120
    %v978 = vpop.permute.xlu0 %977
    %979 = vrot.lane.b32.xlu0 %v905, 120
    %v980 = vpop.permute.xlu0 %979
    %981 = vrot.lane.b32.xlu0 %v906, 120
    %v982 = vpop.permute.xlu0 %981
    %v984 = vsel %vm367, %v978, 0
    %v987 = vsel %vm367, %v980, 0
    %v990 = vsel %vm367, %v982, 0
    %992 = vmatpush.bf16.xpose.msra.mxu0 0
    %993 = vmatpush.bf16.xpose.msra.mxu0 0
    %994 = vmatpush.bf16.xpose.msra.mxu0 0
    %995 = vmatpush.bf16.xpose.msra.mxu0 0
    %996 = vmatpush.bf16.xpose.msra.mxu0 0
    %997 = vmatpush.bf16.xpose.msra.mxu0 0
    %998 = vmatpush.bf16.xpose.msra.mxu0 %v990
    %999 = vmatpush.bf16.xpose.msra.mxu0 %v987
    %1000 = vmatmul.bf16.gmra.mxu0 %v984
    %v1001 = vpop.f32.mrf.mxu0
    %v1002 = vadd.f32 %v878, %v1001
    %v1003 = vpop.f32.mrf.mxu0
    %v1004 = vadd.f32 %v879, %v1003
    %1005 = vdwg.mxu0
    %v1006 = vsel %vm325, %v1002, -inf
    %1007 = vmax.xlane.f32.xlu0 %v1006
    %v1008 = vpop.xlane.xlu0 %1007
    %v1009 = vsel %vm325, %v1004, -inf
    %1010 = vmax.xlane.f32.xlu0 %v1009
    %v1011 = vpop.xlane.xlu0 %1010
    %v1012 = vsub.f32 %v1002, %v1008
    %v1013 = vsub.f32 %v1004, %v1011
    %v1014 = vmul.f32 %v1012, 1.442695
    %v1015 = vpow.pop %v1014
    %v1016 = vmul.f32 %v1013, 1.442695
    %v1017 = vpow.pop %v1016
    %v1018 = vsel %vm325, %v1015, 0.0
    %1019 = vadd.xlane.f32.xlu0 %v1018
    %v1020 = vpop.xlane.xlu0 %1019
    %v1021 = vsel %vm325, %v1017, 0.0
    %1022 = vadd.xlane.f32.xlu0 %v1021
    %v1023 = vpop.xlane.xlu0 %1022
    %v1024 = vrcp.pop %v1020
    %v1025 = vrcp.pop %v1023
    %v1026 = vmul.f32 %v1015, %v1024
    %v1027 = vmul.f32 %v1017, %v1025
    %v1028 = vpack.c.bf16 %v1027, %v1026
    %1029 = vrot.lane.b32.xlu0 %v905, 88
    %v1030 = vpop.permute.xlu0 %1029
    %1031 = vrot.lane.b32.xlu0 %v906, 88
    %v1032 = vpop.permute.xlu0 %1031
    %v1036 = vsel %vm325, %v1028, 0
    %1038 = vmatpush.bf16.msra.mxu0 0
    %1039 = vmatpush.bf16.msra.mxu0 0
    %1040 = vmatpush.bf16.msra.mxu0 0
    %1041 = vmatpush.bf16.msra.mxu0 0
    %1042 = vmatpush.bf16.msra.mxu0 0
    %1043 = vmatpush.bf16.msra.mxu0 0
    %1044 = vmatpush.bf16.msra.mxu0 %v1032
    %1045 = vmatpush.bf16.msra.mxu0 %v1030
    %1046 = vmatmul.bf16.gmra.mxu0 %v1036
    %v1047 = vpop.f32.mrf.mxu0
    %v1048 = vadd.f32 0.0, %v1047
    %v1049 = vpop.f32.mrf.mxu0
    %v1050 = vadd.f32 0.0, %v1049
    %1051 = vdwg.mxu0
    %v1052 = vpack.c.bf16 %v1050, %v1048
    %v1054 = vsel %vm367, %v1052, 0
    %v1057 = vsel %vm504, %v881, 0
    %1059 = vmatpush.bf16.msra.mxu0 0
    %1060 = vmatpush.bf16.msra.mxu0 0
    %1061 = vmatpush.bf16.msra.mxu0 0
    %1062 = vmatpush.bf16.msra.mxu0 0
    %1063 = vmatpush.bf16.msra.mxu0 0
    %1064 = vmatpush.bf16.msra.mxu0 0
    %1065 = vmatpush.bf16.msra.mxu0 0
    %1066 = vmatpush.bf16.msra.mxu0 %v1057
    %1067 = vmatmul.bf16.gmra.mxu0 %v1054
    %v1068 = vpop.f32.mrf.mxu0
    %v1069 = vadd.f32 0.0, %v1068
    %v1070 = vpop.f32.mrf.mxu0
    %v1071 = vadd.f32 0.0, %v1070
    %1072 = vdwg.mxu0
    %v1074 = vsel %vm367, %v976, 0
    %v1077 = vsel %vm504, %v880, 0
    %1079 = vmatpush.bf16.msra.mxu0 0
    %1080 = vmatpush.bf16.msra.mxu0 0
    %1081 = vmatpush.bf16.msra.mxu0 0
    %1082 = vmatpush.bf16.msra.mxu0 0
    %1083 = vmatpush.bf16.msra.mxu0 0
    %1084 = vmatpush.bf16.msra.mxu0 0
    %1085 = vmatpush.bf16.msra.mxu0 0
    %1086 = vmatpush.bf16.msra.mxu0 %v1077
    %1087 = vmatmul.bf16.gmra.mxu0 %v1074
    %v1088 = vpop.f32.mrf.mxu0
    %v1089 = vadd.f32 %v1069, %v1088
    %v1090 = vpop.f32.mrf.mxu0
    %v1091 = vadd.f32 %v1071, %v1090
    %1092 = vdwg.mxu0
    %1093 = vrot.lane.b32.xlu0 %v896, 112
    %v1094 = vpop.permute.xlu0 %1093
    %1095 = vrot.lane.b32.xlu0 %v905, 112
    %v1096 = vpop.permute.xlu0 %1095
    %1097 = vrot.lane.b32.xlu0 %v906, 112
    %v1098 = vpop.permute.xlu0 %1097
    %v1100 = vsel %vm367, %v1094, 0
    %v1103 = vsel %vm367, %v1096, 0
    %v1106 = vsel %vm367, %v1098, 0
    %1108 = vmatpush.bf16.xpose.msra.mxu0 0
    %1109 = vmatpush.bf16.xpose.msra.mxu0 0
    %1110 = vmatpush.bf16.xpose.msra.mxu0 0
    %1111 = vmatpush.bf16.xpose.msra.mxu0 0
    %1112 = vmatpush.bf16.xpose.msra.mxu0 0
    %1113 = vmatpush.bf16.xpose.msra.mxu0 0
    %1114 = vmatpush.bf16.xpose.msra.mxu0 %v1106
    %1115 = vmatpush.bf16.xpose.msra.mxu0 %v1103
    %1116 = vmatmul.bf16.gmra.mxu0 %v1100
    %v1117 = vpop.f32.mrf.mxu0
    %v1118 = vadd.f32 %v878, %v1117
    %v1119 = vpop.f32.mrf.mxu0
    %v1120 = vadd.f32 %v879, %v1119
    %1121 = vdwg.mxu0
    %v1122 = vsel %vm325, %v1118, -inf
    %1123 = vmax.xlane.f32.xlu0 %v1122
    %v1124 = vpop.xlane.xlu0 %1123
    %v1125 = vsel %vm325, %v1120, -inf
    %1126 = vmax.xlane.f32.xlu0 %v1125
    %v1127 = vpop.xlane.xlu0 %1126
    %v1128 = vsub.f32 %v1118, %v1124
    %v1129 = vsub.f32 %v1120, %v1127
    %v1130 = vmul.f32 %v1128, 1.442695
    %v1131 = vpow.pop %v1130
    %v1132 = vmul.f32 %v1129, 1.442695
    %v1133 = vpow.pop %v1132
    %v1134 = vsel %vm325, %v1131, 0.0
    %1135 = vadd.xlane.f32.xlu0 %v1134
    %v1136 = vpop.xlane.xlu0 %1135
    %v1137 = vsel %vm325, %v1133, 0.0
    %1138 = vadd.xlane.f32.xlu0 %v1137
    %v1139 = vpop.xlane.xlu0 %1138
    %v1140 = vrcp.pop %v1136
    %v1141 = vrcp.pop %v1139
    %v1142 = vmul.f32 %v1131, %v1140
    %v1143 = vmul.f32 %v1133, %v1141
    %v1144 = vpack.c.bf16 %v1143, %v1142
    %1145 = vrot.lane.b32.xlu0 %v905, 80
    %v1146 = vpop.permute.xlu0 %1145
    %1147 = vrot.lane.b32.xlu0 %v906, 80
    %v1148 = vpop.permute.xlu0 %1147
    %v1152 = vsel %vm325, %v1144, 0
    %1154 = vmatpush.bf16.msra.mxu0 0
    %1155 = vmatpush.bf16.msra.mxu0 0
    %1156 = vmatpush.bf16.msra.mxu0 0
    %1157 = vmatpush.bf16.msra.mxu0 0
    %1158 = vmatpush.bf16.msra.mxu0 0
    %1159 = vmatpush.bf16.msra.mxu0 0
    %1160 = vmatpush.bf16.msra.mxu0 %v1148
    %1161 = vmatpush.bf16.msra.mxu0 %v1146
    %1162 = vmatmul.bf16.gmra.mxu0 %v1152
    %v1163 = vpop.f32.mrf.mxu0
    %v1164 = vadd.f32 0.0, %v1163
    %v1165 = vpop.f32.mrf.mxu0
    %v1166 = vadd.f32 0.0, %v1165
    %1167 = vdwg.mxu0
    %v1168 = vpack.c.bf16 %v1166, %v1164
    %v1170 = vsel %vm367, %v1168, 0
    %v1173 = vsel %vm504, %v882, 0
    %1175 = vmatpush.bf16.msra.mxu0 0
    %1176 = vmatpush.bf16.msra.mxu0 0
    %1177 = vmatpush.bf16.msra.mxu0 0
    %1178 = vmatpush.bf16.msra.mxu0 0
    %1179 = vmatpush.bf16.msra.mxu0 0
    %1180 = vmatpush.bf16.msra.mxu0 0
    %1181 = vmatpush.bf16.msra.mxu0 0
    %1182 = vmatpush.bf16.msra.mxu0 %v1173
    %1183 = vmatmul.bf16.gmra.mxu0 %v1170
    %v1184 = vpop.f32.mrf.mxu0
    %v1185 = vadd.f32 0.0, %v1184
    %v1186 = vpop.f32.mrf.mxu0
    %v1187 = vadd.f32 0.0, %v1186
    %1188 = vdwg.mxu0
    %v1189 = vadd.f32 %v1089, %v1185
    %v1190 = vadd.f32 %v1091, %v1187
    %1191 = vrot.lane.b32.xlu0 %v896, 104
    %v1192 = vpop.permute.xlu0 %1191
    %1193 = vrot.lane.b32.xlu0 %v905, 104
    %v1194 = vpop.permute.xlu0 %1193
    %1195 = vrot.lane.b32.xlu0 %v906, 104
    %v1196 = vpop.permute.xlu0 %1195
    %v1198 = vsel %vm367, %v1192, 0
    %v1201 = vsel %vm367, %v1194, 0
    %v1204 = vsel %vm367, %v1196, 0
    %1206 = vmatpush.bf16.xpose.msra.mxu0 0
    %1207 = vmatpush.bf16.xpose.msra.mxu0 0
    %1208 = vmatpush.bf16.xpose.msra.mxu0 0
    %1209 = vmatpush.bf16.xpose.msra.mxu0 0
    %1210 = vmatpush.bf16.xpose.msra.mxu0 0
    %1211 = vmatpush.bf16.xpose.msra.mxu0 0
    %1212 = vmatpush.bf16.xpose.msra.mxu0 %v1204
    %1213 = vmatpush.bf16.xpose.msra.mxu0 %v1201
    %1214 = vmatmul.bf16.gmra.mxu0 %v1198
    %v1215 = vpop.f32.mrf.mxu0
    %v1216 = vadd.f32 %v878, %v1215
    %v1217 = vpop.f32.mrf.mxu0
    %v1218 = vadd.f32 %v879, %v1217
    %1219 = vdwg.mxu0
    %v1220 = vsel %vm325, %v1216, -inf
    %1221 = vmax.xlane.f32.xlu0 %v1220
    %v1222 = vpop.xlane.xlu0 %1221
    %v1223 = vsel %vm325, %v1218, -inf
    %1224 = vmax.xlane.f32.xlu0 %v1223
    %v1225 = vpop.xlane.xlu0 %1224
    %v1226 = vsub.f32 %v1216, %v1222
    %v1227 = vsub.f32 %v1218, %v1225
    %v1228 = vmul.f32 %v1226, 1.442695
    %v1229 = vpow.pop %v1228
    %v1230 = vmul.f32 %v1227, 1.442695
    %v1231 = vpow.pop %v1230
    %v1232 = vsel %vm325, %v1229, 0.0
    %1233 = vadd.xlane.f32.xlu0 %v1232
    %v1234 = vpop.xlane.xlu0 %1233
    %v1235 = vsel %vm325, %v1231, 0.0
    %1236 = vadd.xlane.f32.xlu0 %v1235
    %v1237 = vpop.xlane.xlu0 %1236
    %v1238 = vrcp.pop %v1234
    %v1239 = vrcp.pop %v1237
    %v1240 = vmul.f32 %v1229, %v1238
    %v1241 = vmul.f32 %v1231, %v1239
    %v1242 = vpack.c.bf16 %v1241, %v1240
    %1243 = vrot.lane.b32.xlu0 %v905, 72
    %v1244 = vpop.permute.xlu0 %1243
    %1245 = vrot.lane.b32.xlu0 %v906, 72
    %v1246 = vpop.permute.xlu0 %1245
    %v1250 = vsel %vm325, %v1242, 0
    %1252 = vmatpush.bf16.msra.mxu0 0
    %1253 = vmatpush.bf16.msra.mxu0 0
    %1254 = vmatpush.bf16.msra.mxu0 0
    %1255 = vmatpush.bf16.msra.mxu0 0
    %1256 = vmatpush.bf16.msra.mxu0 0
    %1257 = vmatpush.bf16.msra.mxu0 0
    %1258 = vmatpush.bf16.msra.mxu0 %v1246
    %1259 = vmatpush.bf16.msra.mxu0 %v1244
    %1260 = vmatmul.bf16.gmra.mxu0 %v1250
    %v1261 = vpop.f32.mrf.mxu0
    %v1262 = vadd.f32 0.0, %v1261
    %v1263 = vpop.f32.mrf.mxu0
    %v1264 = vadd.f32 0.0, %v1263
    %1265 = vdwg.mxu0
    %v1266 = vpack.c.bf16 %v1264, %v1262
    %v1268 = vsel %vm367, %v1266, 0
    %v1271 = vsel %vm504, %v883, 0
    %1273 = vmatpush.bf16.msra.mxu0 0
    %1274 = vmatpush.bf16.msra.mxu0 0
    %1275 = vmatpush.bf16.msra.mxu0 0
    %1276 = vmatpush.bf16.msra.mxu0 0
    %1277 = vmatpush.bf16.msra.mxu0 0
    %1278 = vmatpush.bf16.msra.mxu0 0
    %1279 = vmatpush.bf16.msra.mxu0 0
    %1280 = vmatpush.bf16.msra.mxu0 %v1271
    %1281 = vmatmul.bf16.gmra.mxu0 %v1268
    %v1282 = vpop.f32.mrf.mxu0
    %v1283 = vadd.f32 0.0, %v1282
    %v1284 = vpop.f32.mrf.mxu0
    %v1285 = vadd.f32 0.0, %v1284
    %1286 = vdwg.mxu0
    %v1287 = vadd.f32 %v1189, %v1283
    %v1288 = vadd.f32 %v1190, %v1285
    %v1289 = vld [vmem:[#allocation19] sm:$0x1]
    %v1291 = vperm.slane %v1289, 0
    %v1293 = vadd.f32 %v1287, %v1291
    %v1294 = vadd.f32 %v1288, %v1291
    %v1295 = vadd.f32 %v1293, %v791
    %v1296 = vadd.f32 %v1294, %v792
    %v1297 = vld [vmem:[#allocation20] sm:$0x1]
    %v1298 = vld [vmem:[#allocation22] sm:$0x1]
    %v1299 = vsel %vm325, %v1295, 0.0
    %1300 = vadd.xlane.f32.xlu0 %v1299
    %v1301 = vpop.xlane.xlu0 %1300
    %v1302 = vsel %vm325, %v1296, 0.0
    %1303 = vadd.xlane.f32.xlu0 %v1302
    %v1304 = vpop.xlane.xlu0 %1303
    %v1305 = vmul.f32 %v1301, %v744
    %v1306 = vmul.f32 %v1304, %v744
    %v1307 = vsub.f32 %v1295, %v1305
    %v1308 = vsub.f32 %v1296, %v1306
    %v1309 = vmul.f32 %v1307, %v1307
    %v1310 = vmul.f32 %v1308, %v1308
    %v1311 = vsel %vm325, %v1309, 0.0
    %1312 = vadd.xlane.f32.xlu0 %v1311
    %v1313 = vpop.xlane.xlu0 %1312
    %v1314 = vsel %vm325, %v1310, 0.0
    %1315 = vadd.xlane.f32.xlu0 %v1314
    %v1316 = vpop.xlane.xlu0 %1315
    %v1317 = vmul.f32 %v1313, %v744
    %v1318 = vmul.f32 %v1316, %v744
    %v1319 = vadd.f32 %v1317, 1e-12
    %v1320 = vadd.f32 %v1318, 1e-12
    %v1321 = vrsqrt.pop %v1319
    %v1322 = vmul.f32 %v1321, %v1319
    %v1323 = vmul.f32 %v1322, %v1321
    %v1324 = vmul.f32 0.5, %v1323
    %v1325 = vsub.f32 1.5, %v1324
    %v1326 = vmul.f32 %v1321, %v1325
    %vm1327 = vweird.f32 %v1319
    %vm1328 = vweird.f32 %v1321
    %vm1329 = vmor %vm1327, %vm1328
    %v1330 = vsel %vm1329, %v1321, %v1326
    %v1331 = vrsqrt.pop %v1320
    %v1332 = vmul.f32 %v1331, %v1320
    %v1333 = vmul.f32 %v1332, %v1331
    %v1334 = vmul.f32 0.5, %v1333
    %v1335 = vsub.f32 1.5, %v1334
    %v1336 = vmul.f32 %v1331, %v1335
    %vm1337 = vweird.f32 %v1320
    %vm1338 = vweird.f32 %v1331
    %vm1339 = vmor %vm1337, %vm1338
    %v1340 = vsel %vm1339, %v1331, %v1336
    %v1341 = vmul.f32 %v1307, %v1330
    %v1342 = vmul.f32 %v1308, %v1340
    %v1344 = vperm.slane %v1297, 0
    %v1346 = vmul.f32 %v1341, %v1344
    %v1347 = vmul.f32 %v1342, %v1344
    %v1349 = vperm.slane %v1298, 0
    %v1351 = vadd.f32 %v1346, %v1349
    %v1352 = vadd.f32 %v1347, %v1349
    %v1353 = vpack.c.bf16 %v1352, %v1351
    %v1354 = vld [vmem:[#allocation23] sm:$0xf]
    %v1355 = vld [vmem:[#allocation23 + $0x4] sm:$0xf]
    %v1356 = vld [vmem:[#allocation23 + $0x8] sm:$0xf]
    %v1357 = vld [vmem:[#allocation23 + $0xc] sm:$0xf]
    %v1358 = vld [vmem:[#allocation25] sm:$0x1]
    %v1360 = vperm.slane %v1358, 0
    %v1366 = vunpack.c.l.b16 %v1354
    %v1367 = vunpack.c.l.b16 %v1355
    %v1368 = vunpack.c.l.b16 %v1356
    %v1369 = vunpack.c.l.b16 %v1357
    %v1370 = vpack.c.b16 %v1367, %v1366
    %v1371 = vpack.c.b16 %v1369, %v1368
    %v1375 = vsel %vm325, %v1353, 0
    %1377 = vmatpush.bf16.msra.mxu0 0
    %1378 = vmatpush.bf16.msra.mxu0 0
    %1379 = vmatpush.bf16.msra.mxu0 0
    %1380 = vmatpush.bf16.msra.mxu0 0
    %1381 = vmatpush.bf16.msra.mxu0 0
    %1382 = vmatpush.bf16.msra.mxu0 0
    %1383 = vmatpush.bf16.msra.mxu0 %v1371
    %1384 = vmatpush.bf16.msra.mxu0 %v1370
    %1385 = vmatmul.bf16.gmra.mxu0 %v1375
    %v1386 = vpop.f32.mrf.mxu0
    %v1387 = vadd.f32 %v1360, %v1386
    %v1388 = vpop.f32.mrf.mxu0
    %v1389 = vadd.f32 %v1360, %v1388
    %1390 = vdwg.mxu0
    %v1391 = vmax.f32 %v1387, 0.0
    %v1392 = vmax.f32 %v1389, 0.0
    %v1393 = vpack.c.bf16 %v1392, %v1391
    %v1394 = vld [vmem:[%s20] sm:$0xf]
    %v1395 = vld [vmem:[%s20 + $0x4] sm:$0xf]
    %v1396 = vld [vmem:[%s20 + $0x8] sm:$0xf]
    %v1397 = vld [vmem:[%s20 + $0xc] sm:$0xf]
    %v1398 = vld [vmem:[%s20 + $0x10] sm:$0xf]
    %v1399 = vld [vmem:[%s20 + $0x14] sm:$0xf]
    %v1400 = vld [vmem:[%s20 + $0x18] sm:$0xf]
    %v1401 = vld [vmem:[%s20 + $0x1c] sm:$0xf]
    %v1402 = vld [vmem:[%s21] sm:$0x1]
    %v1404 = vperm.slane %v1402, 0
    %v1414 = vunpack.c.l.b16 %v1394
    %v1415 = vunpack.c.l.b16 %v1395
    %v1416 = vunpack.c.l.b16 %v1396
    %v1417 = vunpack.c.l.b16 %v1397
    %v1418 = vunpack.c.l.b16 %v1398
    %v1419 = vunpack.c.l.b16 %v1399
    %v1420 = vunpack.c.l.b16 %v1400
    %v1421 = vunpack.c.l.b16 %v1401
    %v1422 = vpack.c.b16 %v1415, %v1414
    %v1423 = vpack.c.b16 %v1417, %v1416
    %v1424 = vpack.c.b16 %v1419, %v1418
    %v1425 = vpack.c.b16 %v1421, %v1420
    %vm1430 = vcmask 523264
    %v1432 = vsel %vm1430, %v1393, 0
    %1434 = vmatpush.bf16.msra.mxu0 0
    %1435 = vmatpush.bf16.msra.mxu0 0
    %1436 = vmatpush.bf16.msra.mxu0 0
    %1437 = vmatpush.bf16.msra.mxu0 0
    %1438 = vmatpush.bf16.msra.mxu0 %v1425
    %1439 = vmatpush.bf16.msra.mxu0 %v1424
    %1440 = vmatpush.bf16.msra.mxu0 %v1423
    %1441 = vmatpush.bf16.msra.mxu0 %v1422
    %1442 = vmatmul.bf16.gmra.mxu0 %v1432
    %v1443 = vpop.f32.mrf.mxu0
    %v1444 = vadd.f32 %v1404, %v1443
    %v1445 = vpop.f32.mrf.mxu0
    %v1446 = vadd.f32 %v1404, %v1445
    %1447 = vdwg.mxu0
    %v1448 = vadd.f32 %v1444, %v1351
    %v1449 = vadd.f32 %v1446, %v1352
    %v1450 = vld [vmem:[%s22] sm:$0x1]
    %v1451 = vld [vmem:[%s23] sm:$0x1]
    %v1452 = vsel %vm325, %v1448, 0.0
    %1453 = vadd.xlane.f32.xlu0 %v1452
    %v1454 = vpop.xlane.xlu0 %1453
    %v1455 = vsel %vm325, %v1449, 0.0
    %1456 = vadd.xlane.f32.xlu0 %v1455
    %v1457 = vpop.xlane.xlu0 %1456
    %v1458 = vmul.f32 %v1454, %v744
    %v1459 = vmul.f32 %v1457, %v744
    %v1460 = vsub.f32 %v1448, %v1458
    %v1461 = vsub.f32 %v1449, %v1459
    %v1462 = vmul.f32 %v1460, %v1460
    %v1463 = vmul.f32 %v1461, %v1461
    %v1464 = vsel %vm325, %v1462, 0.0
    %1465 = vadd.xlane.f32.xlu0 %v1464
    %v1466 = vpop.xlane.xlu0 %1465
    %v1467 = vsel %vm325, %v1463, 0.0
    %1468 = vadd.xlane.f32.xlu0 %v1467
    %v1469 = vpop.xlane.xlu0 %1468
    %v1470 = vmul.f32 %v1466, %v744
    %v1471 = vmul.f32 %v1469, %v744
    %v1472 = vadd.f32 %v1470, 1e-12
    %v1473 = vadd.f32 %v1471, 1e-12
    %v1474 = vrsqrt.pop %v1472
    %v1475 = vmul.f32 %v1474, %v1472
    %v1476 = vmul.f32 %v1475, %v1474
    %v1477 = vmul.f32 0.5, %v1476
    %v1478 = vsub.f32 1.5, %v1477
    %v1479 = vmul.f32 %v1474, %v1478
    %vm1480 = vweird.f32 %v1472
    %vm1481 = vweird.f32 %v1474
    %vm1482 = vmor %vm1480, %vm1481
    %v1483 = vsel %vm1482, %v1474, %v1479
    %v1484 = vrsqrt.pop %v1473
    %v1485 = vmul.f32 %v1484, %v1473
    %v1486 = vmul.f32 %v1485, %v1484
    %v1487 = vmul.f32 0.5, %v1486
    %v1488 = vsub.f32 1.5, %v1487
    %v1489 = vmul.f32 %v1484, %v1488
    %vm1490 = vweird.f32 %v1473
    %vm1491 = vweird.f32 %v1484
    %vm1492 = vmor %vm1490, %vm1491
    %v1493 = vsel %vm1492, %v1484, %v1489
    %v1494 = vmul.f32 %v1460, %v1483
    %v1495 = vmul.f32 %v1461, %v1493
    %v1497 = vperm.slane %v1450, 0
    %v1499 = vmul.f32 %v1494, %v1497
    %v1500 = vmul.f32 %v1495, %v1497
    %v1502 = vperm.slane %v1451, 0
    %v1504 = vadd.f32 %v1499, %v1502
    %v1505 = vadd.f32 %v1500, %v1502
    %1506 = vst.msk [vmem:[#allocation26] sm:$0xff] %vm325, %v1504
    %1507 = vst.msk [vmem:[#allocation26 + $0x8] sm:$0xff] %vm325, %v1505
    // Predicated region
    $region158: #{tpu_custom_call.1} parent=1 // pred_check
      _
    $region159: #{tpu_custom_call.1} parent=1 // pred_check_branch
      %1509 = sbr.rel (0) target = $region161
    $region160: #{tpu_custom_call.1} parent=1 // pred_region
      %1511 = vsyncadd [#allocation4], 0
      %s1512 = sshll.u32 [#allocation26], 4
      %s1513 = int_to_ptr.vmem [resolvable:$true] %s1512
      %s1514 = sshll.u32 %s24, 4
      %s1515 = int_to_ptr.hbm [resolvable:$true] %s1514
      %1520 = dma.vmem_to_hbm [thread:$0]  %s1513, 256, %s1515, [#allocation4], 128, 128, 8
    $region161: #{tpu_custom_call.1} parent=1 // pred_fallthru
      _
    // Predicated region
    $region162: #{tpu_custom_call.1} parent=1 // pred_check
      _
    $region163: #{tpu_custom_call.1} parent=1 // pred_check_branch
      %1522 = sbr.rel (0) target = $region165
    $region164: #{tpu_custom_call.1} parent=1 // pred_region
      %1524 = dma.done [#allocation4], 256
    $region165: #{tpu_custom_call.1} parent=1 // pred_fallthru
      _
    %1525 = vsyncpa [#allocation3], 1
    %1526 = vsyncpa [#allocation6], 1
    %1527 = vsyncpa [#allocation9], 1
    %1528 = vsyncpa [#allocation12], 1
    %1529 = vsyncpa [#allocation15], 1
    %1530 = vsyncpa [#allocation18], 1
    %1531 = vsyncpa [#allocation21], 1
    %1532 = vsyncpa [#allocation24], 1
    %1533 = vsyncpa [#allocation4], 1

</llo_original>
